<compile_context>
chip_gen: v7x
topology: tpu7x:2x2x1
jax: 0.10.0
libtpu: 0.0.40
codegen_flags: <defaults>
</compile_context>

<pallas_src>
import numpy as np

import jax
import jax.numpy as jnp
from jax.experimental import pallas as pl
from jax.experimental.pallas import tpu as pltpu


# ------------------------------ fused kernel --------------------------------

def lenet5_kernel(x_ref, w1_ref, w2_ref, wf1_ref, wf2_ref, wf_ref, o_ref,
                  act1_ref):
    """Whole LeNet5 forward for one sample, entirely in VMEM.

    x_ref   : (1, 2, 16, 128) bf16 - input rows split even/odd, lane = w*3+c (pad 96->128)
    w1_ref  : (5, 128, 256) bf16   - conv1 width-Toeplitz weights (quadrant columns)
    w2_ref  : (5, 128, 256) bf16   - conv2 width-Toeplitz weights
    wf1_ref : (5, 128, 128) bf16   - fc1 weights split by input row h, lane-layout (w,c)
    wf2_ref : (128, 128) f32       - fc2 weights (rows>=120, cols>=84 zero)
    wf_ref  : (128, 128) f32       - fc  weights (rows>=84, cols>=10 zero)
    o_ref   : (1, 1, 128) f32      - logits in lanes [0, 10)
    act1_ref: (14, 128) bf16 VMEM scratch - pooled conv1 activation, lane = w*6+c
    """
    f32 = jnp.float32

    # ---- conv1 (5x5, 3->6) + ReLU + 2x2 maxpool -----------------------------
    # Width and the width-pool are folded into the Toeplitz weight columns; the
    # height-pool uses the even/odd input-row split, so every slice below is a
    # contiguous VMEM read and each output-row parity is 5 accumulated MXU dots.
    def conv1_acc(d):                         # d=0: even output rows, d=1: odd
        acc = None
        for ki in range(5):
            par, off = (d + ki) % 2, (d + ki) // 2
            p = jnp.dot(x_ref[0, par, off:off + 14, :], w1_ref[ki],
                        preferred_element_type=f32)
            acc = p if acc is None else acc + p
        return acc                            # (14, 256)

    y1 = jnp.maximum(conv1_acc(0), conv1_acc(1))        # pool over H
    y1 = jnp.maximum(y1[:, 0:128], y1[:, 128:256])      # pool over W (quadrants)
    act1_ref[...] = jnp.maximum(y1, 0.0).astype(jnp.bfloat16)   # (14, 128)

    # ---- conv2 (5x5, 6->16) + ReLU + 2x2 maxpool ----------------------------
    acc2 = None
    for ki in range(5):
        p = jnp.dot(act1_ref[ki:ki + 10, :], w2_ref[ki],
                    preferred_element_type=f32)
        acc2 = p if acc2 is None else acc2 + p           # (10, 256)
    m2 = jnp.maximum(acc2[:, 0:128], acc2[:, 128:256])   # pool over W
    rows = [jnp.maximum(m2[2 * i:2 * i + 1, :], m2[2 * i + 1:2 * i + 2, :])
            for i in range(5)]                           # pool over H (5 row pairs)
    act2 = jnp.maximum(jnp.concatenate(rows, axis=0), 0.0)      # (5, 128)
    act2 = act2.astype(jnp.bfloat16)                     # lane = w*16 + c

    # ---- fc1 -> ReLU -> fc2 -> ReLU -> fc (tail in f32) ---------------------
    h1 = None
    for h in range(5):
        p = jnp.dot(act2[h:h + 1, :], wf1_ref[h], preferred_element_type=f32)
        h1 = p if h1 is None else h1 + p
    h1 = jnp.maximum(h1, 0.0)                            # (1, 128)
    h2 = jnp.maximum(jnp.dot(h1, wf2_ref[...], preferred_element_type=f32), 0.0)
    o_ref[0] = jnp.dot(h2, wf_ref[...], preferred_element_type=f32)


# -------------------------- one-time weight prep -----------------------------

def prepare_params(params):
    """Host-side, one-time layout prep (all transposes / padding out of the jit).

    Conv weights become width-Toeplitz matrices: for kernel row ki,
      T[ki][j_in*Cin + ci, q*128 + jp*Cout + co] = w[co, ci, ki, (2*jp+q .. )]
    so a dot over the flattened (W, Cin) lane dim produces all conv columns with
    even output columns in lanes [0,128) and odd in [128,256) (width-pool = one
    aligned slice max).  fc1 is re-indexed from PyTorch's (c,h,w) flatten to the
    per-row (w,c) lane layout and split by h.
    """
    w1, w2, wf1, wf2, wf = (np.asarray(p, np.float32) for p in params)

    def conv_toeplitz(w, w_in, k_pad):
        cout, cin, kh, kw = w.shape
        wp = (w_in - kw + 1) // 2
        t = np.zeros((kh, k_pad, 256), np.float32)
        for ki in range(kh):
            for q in range(2):                 # even / odd output-column quadrant
                for jp in range(wp):           # pooled output column
                    j_out = 2 * jp + q
                    col = q * 128 + jp * cout
                    for kj in range(kw):
                        row = (j_out + kj) * cin
                        t[ki, row:row + cin, col:col + cout] = w[:, :, ki, kj].T
        return jnp.asarray(t, jnp.bfloat16)

    w1t = conv_toeplitz(w1, 32, 128)           # (5, 128, 256); input lane = w*3 + c
    w2t = conv_toeplitz(w2, 14, 128)           # (5, 128, 256); input lane = w*6 + c

    wf1t = np.zeros((5, 128, 128), np.float32)
    for h in range(5):
        for w_ in range(5):
            for c in range(16):
                wf1t[h, w_ * 16 + c, :120] = wf1[:, c * 25 + h * 5 + w_]
    wf2t = np.zeros((128, 128), np.float32)
    wf2t[:120, :84] = wf2.T
    wft = np.zeros((128, 128), np.float32)
    wft[:84, :10] = wf.T

    return (w1t, w2t, jnp.asarray(wf1t, jnp.bfloat16),
            jnp.asarray(wf2t), jnp.asarray(wft))


# ------------------------------- forward ------------------------------------

def lenet5_forward(x_nchw, prep):
    """Matches LeNet5.forward; one fused pallas_call, grid over the batch."""
    w1t, w2t, wf1t, wf2t, wft = prep
    B, C, H, W = x_nchw.shape
    assert (C, H, W) == (3, 32, 32)

    # Only glue left in the jitted forward: bf16 cast, NCHW->NHWC, even/odd row
    # split, flatten (W, C) into the lane dim and zero-pad 96 -> 128 lanes.
    x = x_nchw.astype(jnp.bfloat16)
    x = jnp.transpose(x, (0, 2, 3, 1)).reshape(B, 16, 2, 96)
    x = jnp.transpose(x, (0, 2, 1, 3))                   # (B, 2, 16, 96)
    x = jnp.pad(x, ((0, 0), (0, 0), (0, 0), (0, 32)))    # (B, 2, 16, 128)

    out = pl.pallas_call(
        lenet5_kernel,
        out_shape=jax.ShapeDtypeStruct((B, 1, 128), jnp.float32),
        grid=(B,),
        in_specs=[
            pl.BlockSpec((1, 2, 16, 128), lambda i: (i, 0, 0, 0)),
            pl.BlockSpec((5, 128, 256), lambda i: (0, 0, 0)),
            pl.BlockSpec((5, 128, 256), lambda i: (0, 0, 0)),
            pl.BlockSpec((5, 128, 128), lambda i: (0, 0, 0)),
            pl.BlockSpec((128, 128), lambda i: (0, 0)),
            pl.BlockSpec((128, 128), lambda i: (0, 0)),
        ],
        out_specs=pl.BlockSpec((1, 1, 128), lambda i: (i, 0, 0)),
        scratch_shapes=[pltpu.VMEM((14, 128), jnp.bfloat16)],
        compiler_params=pltpu.CompilerParams(
            dimension_semantics=("parallel",)),
    )(x, w1t, w2t, wf1t, wf2t, wft)

    return out[:, 0, :10]


# --------------------------- pure-JAX reference ----------------------------

def reference_forward(x, params):
    w1, w2, wf1, wf2, wf = params
    dn = ('NCHW', 'OIHW', 'NCHW')
    hi = jax.lax.Precision.HIGHEST

    def pool(y):
        return jax.lax.reduce_window(y, -jnp.inf, jax.lax.max,
                                     (1, 1, 2, 2), (1, 1, 2, 2), 'VALID')

    y = jax.lax.conv_general_dilated(x, w1, (1, 1), 'VALID',
                                     dimension_numbers=dn, precision=hi)
    y = pool(jnp.maximum(y, 0.0))
    y = jax.lax.conv_general_dilated(y, w2, (1, 1), 'VALID',
                                     dimension_numbers=dn, precision=hi)
    y = pool(jnp.maximum(y, 0.0))
    y = y.reshape(y.shape[0], -1)
    y = jnp.maximum(jnp.dot(y, wf1.T, precision=hi), 0.0)
    y = jnp.maximum(jnp.dot(y, wf2.T, precision=hi), 0.0)
    return jnp.dot(y, wf.T, precision=hi)


# --------------------------------- main -------------------------------------

if __name__ == "__main__":
    key = jax.random.PRNGKey(0)
    ks = jax.random.split(key, 6)

    B = 2
    # LeNet5's fc1 expects 400 = 16*5*5 features, which implies a 3x32x32 input.
    x = jax.random.normal(ks[0], (B, 3, 32, 32), jnp.float32)

    # Deterministic synthetic parameters in PyTorch layouts (all bias=False).
    w1 = jax.random.normal(ks[1], (6, 3, 5, 5), jnp.float32) * 0.10   # conv1
    w2 = jax.random.normal(ks[2], (16, 6, 5, 5), jnp.float32) * 0.10  # conv2
    wf1 = jax.random.normal(ks[3], (120, 400), jnp.float32) * 0.05    # fc1
    wf2 = jax.random.normal(ks[4], (84, 120), jnp.float32) * 0.05     # fc2
    wf = jax.random.normal(ks[5], (10, 84), jnp.float32) * 0.05       # fc
    params = (w1, w2, wf1, wf2, wf)

    prep = jax.block_until_ready(prepare_params(params))   # one-time, host-side

    out = jax.jit(lenet5_forward)(x, prep)
    out = jax.block_until_ready(out)
    assert out.shape == (B, 10) and out.dtype == jnp.float32

    ref = reference_forward(x, params)
    # Tolerance accounts for bf16 conv/fc1 operands (f32 accumulation, f32 fc tail)
    # vs the f32 Precision.HIGHEST reference.
    max_diff = float(jnp.max(jnp.abs(out - ref)))
    assert jnp.allclose(out, ref, atol=2e-2, rtol=2e-2), (
        "max abs diff = %f" % max_diff)

    print("KERNEL_OK")
</pallas_src>

<mosaic_0001>
module attributes {stable_mosaic.version = 11 : i64} {
  func.func @lenet5_kernel(%arg0: i32, %arg1: memref<1x2x16x128xbf16, #tpu.memory_space<vmem>>, %arg2: memref<5x128x256xbf16, #tpu.memory_space<vmem>>, %arg3: memref<5x128x256xbf16, #tpu.memory_space<vmem>>, %arg4: memref<5x128x128xbf16, #tpu.memory_space<vmem>>, %arg5: memref<128x128xf32, #tpu.memory_space<vmem>>, %arg6: memref<128x128xf32, #tpu.memory_space<vmem>>, %arg7: memref<1x1x128xf32, #tpu.memory_space<vmem>>, %arg8: memref<14x128xbf16, #tpu.memory_space<vmem>>) attributes {dimension_semantics = [#tpu.dimension_semantics<parallel>], iteration_bounds = array<i64: 2>, scalar_prefetch = 0 : i64, scratch_operands = 1 : i64, tpu.core_type = #tpu.core_type<tc>, window_params = [{transform_indices = @transform_0, window_bounds = array<i64: 1, 2, 16, 128>}, {pipeline_mode = #tpu.pipeline_mode<synchronous>, transform_indices = @transform_1, window_bounds = array<i64: 5, 128, 256>}, {pipeline_mode = #tpu.pipeline_mode<synchronous>, transform_indices = @transform_2, window_bounds = array<i64: 5, 128, 256>}, {pipeline_mode = #tpu.pipeline_mode<synchronous>, transform_indices = @transform_3, window_bounds = array<i64: 5, 128, 128>}, {pipeline_mode = #tpu.pipeline_mode<synchronous>, transform_indices = @transform_4, window_bounds = array<i64: 128, 128>}, {pipeline_mode = #tpu.pipeline_mode<synchronous>, transform_indices = @transform_5, window_bounds = array<i64: 128, 128>}, {transform_indices = @transform_6, window_bounds = array<i64: 1, 1, 128>}]} {
    %c0 = arith.constant 0 : index
    %c0_0 = arith.constant 0 : index
    %c0_1 = arith.constant 0 : index
    %c0_2 = arith.constant 0 : index
    %0 = vector.load %arg1[%c0, %c0_0, %c0_1, %c0_2] : memref<1x2x16x128xbf16, #tpu.memory_space<vmem>>, vector<1x1x14x128xbf16>
    %1 = vector.shape_cast %0 : vector<1x1x14x128xbf16> to vector<14x128xbf16>
    %c0_3 = arith.constant 0 : index
    %c0_4 = arith.constant 0 : index
    %c0_5 = arith.constant 0 : index
    %2 = vector.load %arg2[%c0_3, %c0_4, %c0_5] : memref<5x128x256xbf16, #tpu.memory_space<vmem>>, vector<1x128x256xbf16>
    %3 = vector.shape_cast %2 : vector<1x128x256xbf16> to vector<128x256xbf16>
    %cst = arith.constant dense<0.000000e+00> : vector<14x256xf32>
    %4 = tpu.matmul %1, %3, %cst {dimension_numbers = #tpu.dot_dimension_numbers<[1], [0], [0], [1], [0, 0, 1, 1], [], []>} : vector<14x128xbf16>, vector<128x256xbf16>, vector<14x256xf32> -> vector<14x256xf32>
    %c0_6 = arith.constant 0 : index
    %c1 = arith.constant 1 : index
    %c0_7 = arith.constant 0 : index
    %c0_8 = arith.constant 0 : index
    %5 = vector.load %arg1[%c0_6, %c1, %c0_7, %c0_8] : memref<1x2x16x128xbf16, #tpu.memory_space<vmem>>, vector<1x1x14x128xbf16>
    %6 = vector.shape_cast %5 : vector<1x1x14x128xbf16> to vector<14x128xbf16>
    %c1_9 = arith.constant 1 : index
    %c0_10 = arith.constant 0 : index
    %c0_11 = arith.constant 0 : index
    %7 = vector.load %arg2[%c1_9, %c0_10, %c0_11] : memref<5x128x256xbf16, #tpu.memory_space<vmem>>, vector<1x128x256xbf16>
    %8 = vector.shape_cast %7 : vector<1x128x256xbf16> to vector<128x256xbf16>
    %cst_12 = arith.constant dense<0.000000e+00> : vector<14x256xf32>
    %9 = tpu.matmul %6, %8, %cst_12 {dimension_numbers = #tpu.dot_dimension_numbers<[1], [0], [0], [1], [0, 0, 1, 1], [], []>} : vector<14x128xbf16>, vector<128x256xbf16>, vector<14x256xf32> -> vector<14x256xf32>
    %10 = arith.addf %4, %9 : vector<14x256xf32>
    %c0_13 = arith.constant 0 : index
    %c0_14 = arith.constant 0 : index
    %c1_15 = arith.constant 1 : index
    %c0_16 = arith.constant 0 : index
    %11 = vector.load %arg1[%c0_13, %c0_14, %c1_15, %c0_16] : memref<1x2x16x128xbf16, #tpu.memory_space<vmem>>, vector<1x1x14x128xbf16>
    %12 = vector.shape_cast %11 : vector<1x1x14x128xbf16> to vector<14x128xbf16>
    %c2 = arith.constant 2 : index
    %c0_17 = arith.constant 0 : index
    %c0_18 = arith.constant 0 : index
    %13 = vector.load %arg2[%c2, %c0_17, %c0_18] : memref<5x128x256xbf16, #tpu.memory_space<vmem>>, vector<1x128x256xbf16>
    %14 = vector.shape_cast %13 : vector<1x128x256xbf16> to vector<128x256xbf16>
    %cst_19 = arith.constant dense<0.000000e+00> : vector<14x256xf32>
    %15 = tpu.matmul %12, %14, %cst_19 {dimension_numbers = #tpu.dot_dimension_numbers<[1], [0], [0], [1], [0, 0, 1, 1], [], []>} : vector<14x128xbf16>, vector<128x256xbf16>, vector<14x256xf32> -> vector<14x256xf32>
    %16 = arith.addf %10, %15 : vector<14x256xf32>
    %c0_20 = arith.constant 0 : index
    %c1_21 = arith.constant 1 : index
    %c1_22 = arith.constant 1 : index
    %c0_23 = arith.constant 0 : index
    %17 = vector.load %arg1[%c0_20, %c1_21, %c1_22, %c0_23] : memref<1x2x16x128xbf16, #tpu.memory_space<vmem>>, vector<1x1x14x128xbf16>
    %18 = vector.shape_cast %17 : vector<1x1x14x128xbf16> to vector<14x128xbf16>
    %c3 = arith.constant 3 : index
    %c0_24 = arith.constant 0 : index
    %c0_25 = arith.constant 0 : index
    %19 = vector.load %arg2[%c3, %c0_24, %c0_25] : memref<5x128x256xbf16, #tpu.memory_space<vmem>>, vector<1x128x256xbf16>
    %20 = vector.shape_cast %19 : vector<1x128x256xbf16> to vector<128x256xbf16>
    %cst_26 = arith.constant dense<0.000000e+00> : vector<14x256xf32>
    %21 = tpu.matmul %18, %20, %cst_26 {dimension_numbers = #tpu.dot_dimension_numbers<[1], [0], [0], [1], [0, 0, 1, 1], [], []>} : vector<14x128xbf16>, vector<128x256xbf16>, vector<14x256xf32> -> vector<14x256xf32>
    %22 = arith.addf %16, %21 : vector<14x256xf32>
    %c0_27 = arith.constant 0 : index
    %c0_28 = arith.constant 0 : index
    %c2_29 = arith.constant 2 : index
    %c0_30 = arith.constant 0 : index
    %23 = vector.load %arg1[%c0_27, %c0_28, %c2_29, %c0_30] : memref<1x2x16x128xbf16, #tpu.memory_space<vmem>>, vector<1x1x14x128xbf16>
    %24 = vector.shape_cast %23 : vector<1x1x14x128xbf16> to vector<14x128xbf16>
    %c4 = arith.constant 4 : index
    %c0_31 = arith.constant 0 : index
    %c0_32 = arith.constant 0 : index
    %25 = vector.load %arg2[%c4, %c0_31, %c0_32] : memref<5x128x256xbf16, #tpu.memory_space<vmem>>, vector<1x128x256xbf16>
    %26 = vector.shape_cast %25 : vector<1x128x256xbf16> to vector<128x256xbf16>
    %cst_33 = arith.constant dense<0.000000e+00> : vector<14x256xf32>
    %27 = tpu.matmul %24, %26, %cst_33 {dimension_numbers = #tpu.dot_dimension_numbers<[1], [0], [0], [1], [0, 0, 1, 1], [], []>} : vector<14x128xbf16>, vector<128x256xbf16>, vector<14x256xf32> -> vector<14x256xf32>
    %28 = arith.addf %22, %27 : vector<14x256xf32>
    %c0_34 = arith.constant 0 : index
    %c1_35 = arith.constant 1 : index
    %c0_36 = arith.constant 0 : index
    %c0_37 = arith.constant 0 : index
    %29 = vector.load %arg1[%c0_34, %c1_35, %c0_36, %c0_37] : memref<1x2x16x128xbf16, #tpu.memory_space<vmem>>, vector<1x1x14x128xbf16>
    %30 = vector.shape_cast %29 : vector<1x1x14x128xbf16> to vector<14x128xbf16>
    %c0_38 = arith.constant 0 : index
    %c0_39 = arith.constant 0 : index
    %c0_40 = arith.constant 0 : index
    %31 = vector.load %arg2[%c0_38, %c0_39, %c0_40] : memref<5x128x256xbf16, #tpu.memory_space<vmem>>, vector<1x128x256xbf16>
    %32 = vector.shape_cast %31 : vector<1x128x256xbf16> to vector<128x256xbf16>
    %cst_41 = arith.constant dense<0.000000e+00> : vector<14x256xf32>
    %33 = tpu.matmul %30, %32, %cst_41 {dimension_numbers = #tpu.dot_dimension_numbers<[1], [0], [0], [1], [0, 0, 1, 1], [], []>} : vector<14x128xbf16>, vector<128x256xbf16>, vector<14x256xf32> -> vector<14x256xf32>
    %c0_42 = arith.constant 0 : index
    %c0_43 = arith.constant 0 : index
    %c1_44 = arith.constant 1 : index
    %c0_45 = arith.constant 0 : index
    %34 = vector.load %arg1[%c0_42, %c0_43, %c1_44, %c0_45] : memref<1x2x16x128xbf16, #tpu.memory_space<vmem>>, vector<1x1x14x128xbf16>
    %35 = vector.shape_cast %34 : vector<1x1x14x128xbf16> to vector<14x128xbf16>
    %c1_46 = arith.constant 1 : index
    %c0_47 = arith.constant 0 : index
    %c0_48 = arith.constant 0 : index
    %36 = vector.load %arg2[%c1_46, %c0_47, %c0_48] : memref<5x128x256xbf16, #tpu.memory_space<vmem>>, vector<1x128x256xbf16>
    %37 = vector.shape_cast %36 : vector<1x128x256xbf16> to vector<128x256xbf16>
    %cst_49 = arith.constant dense<0.000000e+00> : vector<14x256xf32>
    %38 = tpu.matmul %35, %37, %cst_49 {dimension_numbers = #tpu.dot_dimension_numbers<[1], [0], [0], [1], [0, 0, 1, 1], [], []>} : vector<14x128xbf16>, vector<128x256xbf16>, vector<14x256xf32> -> vector<14x256xf32>
    %39 = arith.addf %33, %38 : vector<14x256xf32>
    %c0_50 = arith.constant 0 : index
    %c1_51 = arith.constant 1 : index
    %c1_52 = arith.constant 1 : index
    %c0_53 = arith.constant 0 : index
    %40 = vector.load %arg1[%c0_50, %c1_51, %c1_52, %c0_53] : memref<1x2x16x128xbf16, #tpu.memory_space<vmem>>, vector<1x1x14x128xbf16>
    %41 = vector.shape_cast %40 : vector<1x1x14x128xbf16> to vector<14x128xbf16>
    %c2_54 = arith.constant 2 : index
    %c0_55 = arith.constant 0 : index
    %c0_56 = arith.constant 0 : index
    %42 = vector.load %arg2[%c2_54, %c0_55, %c0_56] : memref<5x128x256xbf16, #tpu.memory_space<vmem>>, vector<1x128x256xbf16>
    %43 = vector.shape_cast %42 : vector<1x128x256xbf16> to vector<128x256xbf16>
    %cst_57 = arith.constant dense<0.000000e+00> : vector<14x256xf32>
    %44 = tpu.matmul %41, %43, %cst_57 {dimension_numbers = #tpu.dot_dimension_numbers<[1], [0], [0], [1], [0, 0, 1, 1], [], []>} : vector<14x128xbf16>, vector<128x256xbf16>, vector<14x256xf32> -> vector<14x256xf32>
    %45 = arith.addf %39, %44 : vector<14x256xf32>
    %c0_58 = arith.constant 0 : index
    %c0_59 = arith.constant 0 : index
    %c2_60 = arith.constant 2 : index
    %c0_61 = arith.constant 0 : index
    %46 = vector.load %arg1[%c0_58, %c0_59, %c2_60, %c0_61] : memref<1x2x16x128xbf16, #tpu.memory_space<vmem>>, vector<1x1x14x128xbf16>
    %47 = vector.shape_cast %46 : vector<1x1x14x128xbf16> to vector<14x128xbf16>
    %c3_62 = arith.constant 3 : index
    %c0_63 = arith.constant 0 : index
    %c0_64 = arith.constant 0 : index
    %48 = vector.load %arg2[%c3_62, %c0_63, %c0_64] : memref<5x128x256xbf16, #tpu.memory_space<vmem>>, vector<1x128x256xbf16>
    %49 = vector.shape_cast %48 : vector<1x128x256xbf16> to vector<128x256xbf16>
    %cst_65 = arith.constant dense<0.000000e+00> : vector<14x256xf32>
    %50 = tpu.matmul %47, %49, %cst_65 {dimension_numbers = #tpu.dot_dimension_numbers<[1], [0], [0], [1], [0, 0, 1, 1], [], []>} : vector<14x128xbf16>, vector<128x256xbf16>, vector<14x256xf32> -> vector<14x256xf32>
    %51 = arith.addf %45, %50 : vector<14x256xf32>
    %c0_66 = arith.constant 0 : index
    %c1_67 = arith.constant 1 : index
    %c2_68 = arith.constant 2 : index
    %c0_69 = arith.constant 0 : index
    %52 = vector.load %arg1[%c0_66, %c1_67, %c2_68, %c0_69] : memref<1x2x16x128xbf16, #tpu.memory_space<vmem>>, vector<1x1x14x128xbf16>
    %53 = vector.shape_cast %52 : vector<1x1x14x128xbf16> to vector<14x128xbf16>
    %c4_70 = arith.constant 4 : index
    %c0_71 = arith.constant 0 : index
    %c0_72 = arith.constant 0 : index
    %54 = vector.load %arg2[%c4_70, %c0_71, %c0_72] : memref<5x128x256xbf16, #tpu.memory_space<vmem>>, vector<1x128x256xbf16>
    %55 = vector.shape_cast %54 : vector<1x128x256xbf16> to vector<128x256xbf16>
    %cst_73 = arith.constant dense<0.000000e+00> : vector<14x256xf32>
    %56 = tpu.matmul %53, %55, %cst_73 {dimension_numbers = #tpu.dot_dimension_numbers<[1], [0], [0], [1], [0, 0, 1, 1], [], []>} : vector<14x128xbf16>, vector<128x256xbf16>, vector<14x256xf32> -> vector<14x256xf32>
    %57 = arith.addf %51, %56 : vector<14x256xf32>
    %58 = arith.maximumf %28, %57 : vector<14x256xf32>
    %59 = vector.extract_strided_slice %58 {offsets = [0, 0], sizes = [14, 128], strides = [1, 1]} : vector<14x256xf32> to vector<14x128xf32>
    %60 = vector.extract_strided_slice %58 {offsets = [0, 128], sizes = [14, 128], strides = [1, 1]} : vector<14x256xf32> to vector<14x128xf32>
    %61 = arith.maximumf %59, %60 : vector<14x128xf32>
    %cst_74 = arith.constant 0.000000e+00 : f32
    %62 = vector.broadcast %cst_74 : f32 to vector<14x128xf32>
    %63 = arith.maximumf %61, %62 : vector<14x128xf32>
    %64 = arith.truncf %63 : vector<14x128xf32> to vector<14x128xbf16>
    %c0_75 = arith.constant 0 : index
    %c0_76 = arith.constant 0 : index
    %65 = vector.load %arg8[%c0_75, %c0_76] : memref<14x128xbf16, #tpu.memory_space<vmem>>, vector<14x128xbf16>
    tpu.vector_store %arg8[%c0_75, %c0_76], %64 {strides = array<i32>} : memref<14x128xbf16, #tpu.memory_space<vmem>>, vector<14x128xbf16>,
    %c0_77 = arith.constant 0 : index
    %c0_78 = arith.constant 0 : index
    %66 = vector.load %arg8[%c0_77, %c0_78] : memref<14x128xbf16, #tpu.memory_space<vmem>>, vector<10x128xbf16>
    %c0_79 = arith.constant 0 : index
    %c0_80 = arith.constant 0 : index
    %c0_81 = arith.constant 0 : index
    %67 = vector.load %arg3[%c0_79, %c0_80, %c0_81] : memref<5x128x256xbf16, #tpu.memory_space<vmem>>, vector<1x128x256xbf16>
    %68 = vector.shape_cast %67 : vector<1x128x256xbf16> to vector<128x256xbf16>
    %cst_82 = arith.constant dense<0.000000e+00> : vector<10x256xf32>
    %69 = tpu.matmul %66, %68, %cst_82 {dimension_numbers = #tpu.dot_dimension_numbers<[1], [0], [0], [1], [0, 0, 1, 1], [], []>} : vector<10x128xbf16>, vector<128x256xbf16>, vector<10x256xf32> -> vector<10x256xf32>
    %c1_83 = arith.constant 1 : index
    %c0_84 = arith.constant 0 : index
    %70 = vector.load %arg8[%c1_83, %c0_84] : memref<14x128xbf16, #tpu.memory_space<vmem>>, vector<10x128xbf16>
    %c1_85 = arith.constant 1 : index
    %c0_86 = arith.constant 0 : index
    %c0_87 = arith.constant 0 : index
    %71 = vector.load %arg3[%c1_85, %c0_86, %c0_87] : memref<5x128x256xbf16, #tpu.memory_space<vmem>>, vector<1x128x256xbf16>
    %72 = vector.shape_cast %71 : vector<1x128x256xbf16> to vector<128x256xbf16>
    %cst_88 = arith.constant dense<0.000000e+00> : vector<10x256xf32>
    %73 = tpu.matmul %70, %72, %cst_88 {dimension_numbers = #tpu.dot_dimension_numbers<[1], [0], [0], [1], [0, 0, 1, 1], [], []>} : vector<10x128xbf16>, vector<128x256xbf16>, vector<10x256xf32> -> vector<10x256xf32>
    %74 = arith.addf %69, %73 : vector<10x256xf32>
    %c2_89 = arith.constant 2 : index
    %c0_90 = arith.constant 0 : index
    %75 = vector.load %arg8[%c2_89, %c0_90] : memref<14x128xbf16, #tpu.memory_space<vmem>>, vector<10x128xbf16>
    %c2_91 = arith.constant 2 : index
    %c0_92 = arith.constant 0 : index
    %c0_93 = arith.constant 0 : index
    %76 = vector.load %arg3[%c2_91, %c0_92, %c0_93] : memref<5x128x256xbf16, #tpu.memory_space<vmem>>, vector<1x128x256xbf16>
    %77 = vector.shape_cast %76 : vector<1x128x256xbf16> to vector<128x256xbf16>
    %cst_94 = arith.constant dense<0.000000e+00> : vector<10x256xf32>
    %78 = tpu.matmul %75, %77, %cst_94 {dimension_numbers = #tpu.dot_dimension_numbers<[1], [0], [0], [1], [0, 0, 1, 1], [], []>} : vector<10x128xbf16>, vector<128x256xbf16>, vector<10x256xf32> -> vector<10x256xf32>
    %79 = arith.addf %74, %78 : vector<10x256xf32>
    %c3_95 = arith.constant 3 : index
    %c0_96 = arith.constant 0 : index
    %80 = vector.load %arg8[%c3_95, %c0_96] : memref<14x128xbf16, #tpu.memory_space<vmem>>, vector<10x128xbf16>
    %c3_97 = arith.constant 3 : index
    %c0_98 = arith.constant 0 : index
    %c0_99 = arith.constant 0 : index
    %81 = vector.load %arg3[%c3_97, %c0_98, %c0_99] : memref<5x128x256xbf16, #tpu.memory_space<vmem>>, vector<1x128x256xbf16>
    %82 = vector.shape_cast %81 : vector<1x128x256xbf16> to vector<128x256xbf16>
    %cst_100 = arith.constant dense<0.000000e+00> : vector<10x256xf32>
    %83 = tpu.matmul %80, %82, %cst_100 {dimension_numbers = #tpu.dot_dimension_numbers<[1], [0], [0], [1], [0, 0, 1, 1], [], []>} : vector<10x128xbf16>, vector<128x256xbf16>, vector<10x256xf32> -> vector<10x256xf32>
    %84 = arith.addf %79, %83 : vector<10x256xf32>
    %c4_101 = arith.constant 4 : index
    %c0_102 = arith.constant 0 : index
    %85 = vector.load %arg8[%c4_101, %c0_102] : memref<14x128xbf16, #tpu.memory_space<vmem>>, vector<10x128xbf16>
    %c4_103 = arith.constant 4 : index
    %c0_104 = arith.constant 0 : index
    %c0_105 = arith.constant 0 : index
    %86 = vector.load %arg3[%c4_103, %c0_104, %c0_105] : memref<5x128x256xbf16, #tpu.memory_space<vmem>>, vector<1x128x256xbf16>
    %87 = vector.shape_cast %86 : vector<1x128x256xbf16> to vector<128x256xbf16>
    %cst_106 = arith.constant dense<0.000000e+00> : vector<10x256xf32>
    %88 = tpu.matmul %85, %87, %cst_106 {dimension_numbers = #tpu.dot_dimension_numbers<[1], [0], [0], [1], [0, 0, 1, 1], [], []>} : vector<10x128xbf16>, vector<128x256xbf16>, vector<10x256xf32> -> vector<10x256xf32>
    %89 = arith.addf %84, %88 : vector<10x256xf32>
    %90 = vector.extract_strided_slice %89 {offsets = [0, 0], sizes = [10, 128], strides = [1, 1]} : vector<10x256xf32> to vector<10x128xf32>
    %91 = vector.extract_strided_slice %89 {offsets = [0, 128], sizes = [10, 128], strides = [1, 1]} : vector<10x256xf32> to vector<10x128xf32>
    %92 = arith.maximumf %90, %91 : vector<10x128xf32>
    %93 = vector.extract_strided_slice %92 {offsets = [0, 0], sizes = [1, 128], strides = [1, 1]} : vector<10x128xf32> to vector<1x128xf32>
    %94 = vector.extract_strided_slice %92 {offsets = [1, 0], sizes = [1, 128], strides = [1, 1]} : vector<10x128xf32> to vector<1x128xf32>
    %95 = arith.maximumf %93, %94 : vector<1x128xf32>
    %96 = vector.extract_strided_slice %92 {offsets = [2, 0], sizes = [1, 128], strides = [1, 1]} : vector<10x128xf32> to vector<1x128xf32>
    %97 = vector.extract_strided_slice %92 {offsets = [3, 0], sizes = [1, 128], strides = [1, 1]} : vector<10x128xf32> to vector<1x128xf32>
    %98 = arith.maximumf %96, %97 : vector<1x128xf32>
    %99 = vector.extract_strided_slice %92 {offsets = [4, 0], sizes = [1, 128], strides = [1, 1]} : vector<10x128xf32> to vector<1x128xf32>
    %100 = vector.extract_strided_slice %92 {offsets = [5, 0], sizes = [1, 128], strides = [1, 1]} : vector<10x128xf32> to vector<1x128xf32>
    %101 = arith.maximumf %99, %100 : vector<1x128xf32>
    %102 = vector.extract_strided_slice %92 {offsets = [6, 0], sizes = [1, 128], strides = [1, 1]} : vector<10x128xf32> to vector<1x128xf32>
    %103 = vector.extract_strided_slice %92 {offsets = [7, 0], sizes = [1, 128], strides = [1, 1]} : vector<10x128xf32> to vector<1x128xf32>
    %104 = arith.maximumf %102, %103 : vector<1x128xf32>
    %105 = vector.extract_strided_slice %92 {offsets = [8, 0], sizes = [1, 128], strides = [1, 1]} : vector<10x128xf32> to vector<1x128xf32>
    %106 = vector.extract_strided_slice %92 {offsets = [9, 0], sizes = [1, 128], strides = [1, 1]} : vector<10x128xf32> to vector<1x128xf32>
    %107 = arith.maximumf %105, %106 : vector<1x128xf32>
    %108 = tpu.concatenate %95, %98, %101, %104, %107 in 0 : vector<1x128xf32>, vector<1x128xf32>, vector<1x128xf32>, vector<1x128xf32>, vector<1x128xf32> -> vector<5x128xf32>
    %cst_107 = arith.constant 0.000000e+00 : f32
    %109 = vector.broadcast %cst_107 : f32 to vector<5x128xf32>
    %110 = arith.maximumf %108, %109 : vector<5x128xf32>
    %111 = arith.truncf %110 : vector<5x128xf32> to vector<5x128xbf16>
    %112 = vector.extract_strided_slice %111 {offsets = [0, 0], sizes = [1, 128], strides = [1, 1]} : vector<5x128xbf16> to vector<1x128xbf16>
    %c0_108 = arith.constant 0 : index
    %c0_109 = arith.constant 0 : index
    %c0_110 = arith.constant 0 : index
    %113 = vector.load %arg4[%c0_108, %c0_109, %c0_110] : memref<5x128x128xbf16, #tpu.memory_space<vmem>>, vector<1x128x128xbf16>
    %114 = vector.shape_cast %113 : vector<1x128x128xbf16> to vector<128x128xbf16>
    %cst_111 = arith.constant dense<0.000000e+00> : vector<1x128xf32>
    %115 = tpu.matmul %112, %114, %cst_111 {dimension_numbers = #tpu.dot_dimension_numbers<[1], [0], [0], [1], [0, 0, 1, 1], [], []>} : vector<1x128xbf16>, vector<128x128xbf16>, vector<1x128xf32> -> vector<1x128xf32>
    %116 = vector.extract_strided_slice %111 {offsets = [1, 0], sizes = [1, 128], strides = [1, 1]} : vector<5x128xbf16> to vector<1x128xbf16>
    %c1_112 = arith.constant 1 : index
    %c0_113 = arith.constant 0 : index
    %c0_114 = arith.constant 0 : index
    %117 = vector.load %arg4[%c1_112, %c0_113, %c0_114] : memref<5x128x128xbf16, #tpu.memory_space<vmem>>, vector<1x128x128xbf16>
    %118 = vector.shape_cast %117 : vector<1x128x128xbf16> to vector<128x128xbf16>
    %cst_115 = arith.constant dense<0.000000e+00> : vector<1x128xf32>
    %119 = tpu.matmul %116, %118, %cst_115 {dimension_numbers = #tpu.dot_dimension_numbers<[1], [0], [0], [1], [0, 0, 1, 1], [], []>} : vector<1x128xbf16>, vector<128x128xbf16>, vector<1x128xf32> -> vector<1x128xf32>
    %120 = arith.addf %115, %119 : vector<1x128xf32>
    %121 = vector.extract_strided_slice %111 {offsets = [2, 0], sizes = [1, 128], strides = [1, 1]} : vector<5x128xbf16> to vector<1x128xbf16>
    %c2_116 = arith.constant 2 : index
    %c0_117 = arith.constant 0 : index
    %c0_118 = arith.constant 0 : index
    %122 = vector.load %arg4[%c2_116, %c0_117, %c0_118] : memref<5x128x128xbf16, #tpu.memory_space<vmem>>, vector<1x128x128xbf16>
    %123 = vector.shape_cast %122 : vector<1x128x128xbf16> to vector<128x128xbf16>
    %cst_119 = arith.constant dense<0.000000e+00> : vector<1x128xf32>
    %124 = tpu.matmul %121, %123, %cst_119 {dimension_numbers = #tpu.dot_dimension_numbers<[1], [0], [0], [1], [0, 0, 1, 1], [], []>} : vector<1x128xbf16>, vector<128x128xbf16>, vector<1x128xf32> -> vector<1x128xf32>
    %125 = arith.addf %120, %124 : vector<1x128xf32>
    %126 = vector.extract_strided_slice %111 {offsets = [3, 0], sizes = [1, 128], strides = [1, 1]} : vector<5x128xbf16> to vector<1x128xbf16>
    %c3_120 = arith.constant 3 : index
    %c0_121 = arith.constant 0 : index
    %c0_122 = arith.constant 0 : index
    %127 = vector.load %arg4[%c3_120, %c0_121, %c0_122] : memref<5x128x128xbf16, #tpu.memory_space<vmem>>, vector<1x128x128xbf16>
    %128 = vector.shape_cast %127 : vector<1x128x128xbf16> to vector<128x128xbf16>
    %cst_123 = arith.constant dense<0.000000e+00> : vector<1x128xf32>
    %129 = tpu.matmul %126, %128, %cst_123 {dimension_numbers = #tpu.dot_dimension_numbers<[1], [0], [0], [1], [0, 0, 1, 1], [], []>} : vector<1x128xbf16>, vector<128x128xbf16>, vector<1x128xf32> -> vector<1x128xf32>
    %130 = arith.addf %125, %129 : vector<1x128xf32>
    %131 = vector.extract_strided_slice %111 {offsets = [4, 0], sizes = [1, 128], strides = [1, 1]} : vector<5x128xbf16> to vector<1x128xbf16>
    %c4_124 = arith.constant 4 : index
    %c0_125 = arith.constant 0 : index
    %c0_126 = arith.constant 0 : index
    %132 = vector.load %arg4[%c4_124, %c0_125, %c0_126] : memref<5x128x128xbf16, #tpu.memory_space<vmem>>, vector<1x128x128xbf16>
    %133 = vector.shape_cast %132 : vector<1x128x128xbf16> to vector<128x128xbf16>
    %cst_127 = arith.constant dense<0.000000e+00> : vector<1x128xf32>
    %134 = tpu.matmul %131, %133, %cst_127 {dimension_numbers = #tpu.dot_dimension_numbers<[1], [0], [0], [1], [0, 0, 1, 1], [], []>} : vector<1x128xbf16>, vector<128x128xbf16>, vector<1x128xf32> -> vector<1x128xf32>
    %135 = arith.addf %130, %134 : vector<1x128xf32>
    %cst_128 = arith.constant 0.000000e+00 : f32
    %136 = vector.broadcast %cst_128 : f32 to vector<1x128xf32>
    %137 = arith.maximumf %135, %136 : vector<1x128xf32>
    %c0_129 = arith.constant 0 : index
    %c0_130 = arith.constant 0 : index
    %138 = vector.load %arg5[%c0_129, %c0_130] : memref<128x128xf32, #tpu.memory_space<vmem>>, vector<128x128xf32>
    %cst_131 = arith.constant dense<0.000000e+00> : vector<1x128xf32>
    %139 = tpu.matmul %137, %138, %cst_131 {dimension_numbers = #tpu.dot_dimension_numbers<[1], [0], [0], [1], [0, 0, 1, 1], [], []>} : vector<1x128xf32>, vector<128x128xf32>, vector<1x128xf32> -> vector<1x128xf32>
    %cst_132 = arith.constant 0.000000e+00 : f32
    %140 = vector.broadcast %cst_132 : f32 to vector<1x128xf32>
    %141 = arith.maximumf %139, %140 : vector<1x128xf32>
    %c0_133 = arith.constant 0 : index
    %c0_134 = arith.constant 0 : index
    %142 = vector.load %arg6[%c0_133, %c0_134] : memref<128x128xf32, #tpu.memory_space<vmem>>, vector<128x128xf32>
    %cst_135 = arith.constant dense<0.000000e+00> : vector<1x128xf32>
    %143 = tpu.matmul %141, %142, %cst_135 {dimension_numbers = #tpu.dot_dimension_numbers<[1], [0], [0], [1], [0, 0, 1, 1], [], []>} : vector<1x128xf32>, vector<128x128xf32>, vector<1x128xf32> -> vector<1x128xf32>
    %c0_136 = arith.constant 0 : index
    %c0_137 = arith.constant 0 : index
    %c0_138 = arith.constant 0 : index
    %144 = vector.load %arg7[%c0_136, %c0_137, %c0_138] : memref<1x1x128xf32, #tpu.memory_space<vmem>>, vector<1x1x128xf32>
    %145 = vector.shape_cast %144 : vector<1x1x128xf32> to vector<1x128xf32>
    %146 = vector.shape_cast %143 : vector<1x128xf32> to vector<1x1x128xf32>
    tpu.vector_store %arg7[%c0_136, %c0_137, %c0_138], %146 {strides = array<i32>} : memref<1x1x128xf32, #tpu.memory_space<vmem>>, vector<1x1x128xf32>,
    return
  }
  func.func @transform_0(%arg0: i32) -> (i32, i32, i32, i32) {
    %c0_i32 = arith.constant 0 : i32
    %c0_i32_0 = arith.constant 0 : i32
    %c0_i32_1 = arith.constant 0 : i32
    %c0_i32_2 = arith.constant 0 : i32
    return %arg0, %c0_i32, %c0_i32_0, %c0_i32_1 : i32, i32, i32, i32
  }
  func.func @transform_1(%arg0: i32) -> (i32, i32, i32) {
    %c0_i32 = arith.constant 0 : i32
    %c0_i32_0 = arith.constant 0 : i32
    %c0_i32_1 = arith.constant 0 : i32
    %c0_i32_2 = arith.constant 0 : i32
    return %c0_i32, %c0_i32_0, %c0_i32_1 : i32, i32, i32
  }
  func.func @transform_2(%arg0: i32) -> (i32, i32, i32) {
    %c0_i32 = arith.constant 0 : i32
    %c0_i32_0 = arith.constant 0 : i32
    %c0_i32_1 = arith.constant 0 : i32
    %c0_i32_2 = arith.constant 0 : i32
    return %c0_i32, %c0_i32_0, %c0_i32_1 : i32, i32, i32
  }
  func.func @transform_3(%arg0: i32) -> (i32, i32, i32) {
    %c0_i32 = arith.constant 0 : i32
    %c0_i32_0 = arith.constant 0 : i32
    %c0_i32_1 = arith.constant 0 : i32
    %c0_i32_2 = arith.constant 0 : i32
    return %c0_i32, %c0_i32_0, %c0_i32_1 : i32, i32, i32
  }
  func.func @transform_4(%arg0: i32) -> (i32, i32) {
    %c0_i32 = arith.constant 0 : i32
    %c0_i32_0 = arith.constant 0 : i32
    %c0_i32_1 = arith.constant 0 : i32
    return %c0_i32, %c0_i32_0 : i32, i32
  }
  func.func @transform_5(%arg0: i32) -> (i32, i32) {
    %c0_i32 = arith.constant 0 : i32
    %c0_i32_0 = arith.constant 0 : i32
    %c0_i32_1 = arith.constant 0 : i32
    return %c0_i32, %c0_i32_0 : i32, i32
  }
  func.func @transform_6(%arg0: i32) -> (i32, i32, i32) {
    %c0_i32 = arith.constant 0 : i32
    %c0_i32_0 = arith.constant 0 : i32
    %c0_i32_1 = arith.constant 0 : i32
    return %arg0, %c0_i32, %c0_i32_0 : i32, i32, i32
  }
}

</mosaic_0001>

<llo_original>
// kernel: lenet5_forward.1
$region0: #{lenet5_forward.1}
  #allocation0 [shape = 'u32[]', space=smem, size = 0x4, offset = 0x4, fixed_abs, tag = 'smem constant byte address 0x4 - core index']
  #allocation1 [shape = 'u32[144,128]{1,0:T(1,128)}', space=vmem, size = 0x12000, scoped, tag = 'internal scratch']
  #allocation2 [shape = 'bf16[14,128]{1,0:T(8,128)(2,1)}', space=vmem, size = 0x1000, scoped, tag = 'scratch operand']
  %s0 = inlined_call_operand.vmem [shape: bf16[2,2,16,128], index: 0, kind: input, shape index: {}]
  %s1 = inlined_call_operand.vmem [shape: bf16[5,128,256], index: 1, kind: input, shape index: {}]
  %s2 = inlined_call_operand.vmem [shape: bf16[5,128,256], index: 2, kind: input, shape index: {}]
  %s3 = inlined_call_operand.vmem [shape: bf16[5,128,128], index: 3, kind: input, shape index: {}]
  %s4 = inlined_call_operand.vmem [shape: f32[128,128], index: 4, kind: input, shape index: {}]
  %s5 = inlined_call_operand.vmem [shape: f32[128,128], index: 5, kind: input, shape index: {}]
  %s6 = inlined_call_operand.hbm [shape: f32[2,1,128], index: 6, kind: output, shape index: {}]
  %s7 = sld [smem:[#allocation0]]
  $region57: #{lenet5_forward.1} parent=0
    _
  %s9 = ssub.s32 1, %s7
  %s10 = scalar_select 0, %s9, %s7
  $region1: #{lenet5_forward.1} parent=0
    #allocation3 [shape = 'u8[1024]{0}', space=vmem, size = 0x400, scoped, tag = 'output window, operand 0']
    #allocation4 [shape = 's32[2]{0}', space=sflag, size = 0x8, scoped, tag = 'scoped memory for lenet5_forward.1']
    %11 = vsyncpa [#allocation4], 0
    %s12 = scalar_lea.sflag [#allocation4], 1
    %13 = vsyncpa %s12, 0
    loop: start=0, step=1, limit=4
    $region2: #{lenet5_forward.1} parent=1 // loop_pre_header
      _
    $region3: #{lenet5_forward.1} parent=1 // loop_header
      %s15 = sphi 0, %s19
      %p16 = scmp.ge.s32.totalorder %s15, 4
      %s25 = sphi 0, %s27
      %s28 = sphi 0, %s25
      %s29 = sphi 0, %s28
      %s45 = sphi 0, %s29
      %s49 = sphi 0, %s49
      %s51 = sphi 0, %s49
      %s52 = sphi 0, %s51
      %s66 = sphi 0, %s52
      %s70 = sphi 0, %s70
      %s72 = sphi 0, %s70
      %s73 = sphi 0, %s72
      %s87 = sphi 0, %s73
      %s91 = sphi 0, %s91
      %s93 = sphi 0, %s91
      %s94 = sphi 0, %s93
      %s108 = sphi 0, %s94
      %s112 = sphi 0, %s112
      %s114 = sphi 0, %s112
      %s115 = sphi 0, %s114
      %s129 = sphi 0, %s115
      %s133 = sphi 0, %s133
      %s135 = sphi 0, %s133
      %s136 = sphi 0, %s135
      %s150 = sphi 0, %s136
      %s156 = sphi 0, %s158
      %s159 = sphi 0, %s156
      %s160 = sphi 0, %s159
      %s176 = sphi 0, %s160
    $region4: #{lenet5_forward.1} parent=1 // loop_header_branch
      %18 = sbr.rel (%p16) target = $region8
    $region5: #{lenet5_forward.1} parent=1 // loop_body
      %s20 = ssub.s32 %s15, 1
      %s21 = ssub.s32 %s15, 2
      %s22 = sadd.s32 %s15, 1
      %s23 = ssub.s32 %s15, %s22
      %p24 = scmp.eq.s32.totalorder %s23, 0
      %s26 = sadd.s32 %s25, 1
      %s27 = scalar_select %p24, %s25, %s26
      %p30 = pneg %p24
      %p31 = scmp.eq.s32.totalorder %s15, 1
      %p32 = por %p30, %p31
      %p33 = scmp.ne.s32.totalorder %s25, %s28
      %p34 = scmp.eq.s32.totalorder %s15, 0
      %p35 = por %p33, %p34
      %p36 = scmp.ne.s32.totalorder %s25, %s28
      %p37 = scmp.eq.s32.totalorder %s20, 1
      %p38 = por %p36, %p37
      %p39 = scmp.ne.s32.totalorder %s28, %s29
      %p40 = scmp.eq.s32.totalorder %s20, 0
      %p41 = por %p39, %p40
      %p42 = scmp.ne.s32.totalorder %s28, %s29
      %p43 = scmp.eq.s32.totalorder %s21, 1
      %p44 = por %p42, %p43
      %p46 = scmp.ne.s32.totalorder %s29, %s45
      %p47 = scmp.eq.s32.totalorder %s21, 0
      %p48 = por %p46, %p47
      %s50 = sadd.s32 %s49, 1
      %p53 = scmp.eq.s32.totalorder %s15, 1
      %p54 = scmp.ne.s32.totalorder %s49, %s51
      %p55 = scmp.eq.s32.totalorder %s15, 0
      %p56 = por %p54, %p55
      %p57 = scmp.ne.s32.totalorder %s49, %s51
      %p58 = scmp.eq.s32.totalorder %s20, 1
      %p59 = por %p57, %p58
      %p60 = scmp.ne.s32.totalorder %s51, %s52
      %p61 = scmp.eq.s32.totalorder %s20, 0
      %p62 = por %p60, %p61
      %p63 = scmp.ne.s32.totalorder %s51, %s52
      %p64 = scmp.eq.s32.totalorder %s21, 1
      %p65 = por %p63, %p64
      %p67 = scmp.ne.s32.totalorder %s52, %s66
      %p68 = scmp.eq.s32.totalorder %s21, 0
      %p69 = por %p67, %p68
      %s71 = sadd.s32 %s70, 1
      %p74 = scmp.eq.s32.totalorder %s15, 1
      %p75 = scmp.ne.s32.totalorder %s70, %s72
      %p76 = scmp.eq.s32.totalorder %s15, 0
      %p77 = por %p75, %p76
      %p78 = scmp.ne.s32.totalorder %s70, %s72
      %p79 = scmp.eq.s32.totalorder %s20, 1
      %p80 = por %p78, %p79
      %p81 = scmp.ne.s32.totalorder %s72, %s73
      %p82 = scmp.eq.s32.totalorder %s20, 0
      %p83 = por %p81, %p82
      %p84 = scmp.ne.s32.totalorder %s72, %s73
      %p85 = scmp.eq.s32.totalorder %s21, 1
      %p86 = por %p84, %p85
      %p88 = scmp.ne.s32.totalorder %s73, %s87
      %p89 = scmp.eq.s32.totalorder %s21, 0
      %p90 = por %p88, %p89
      %s92 = sadd.s32 %s91, 1
      %p95 = scmp.eq.s32.totalorder %s15, 1
      %p96 = scmp.ne.s32.totalorder %s91, %s93
      %p97 = scmp.eq.s32.totalorder %s15, 0
      %p98 = por %p96, %p97
      %p99 = scmp.ne.s32.totalorder %s91, %s93
      %p100 = scmp.eq.s32.totalorder %s20, 1
      %p101 = por %p99, %p100
      %p102 = scmp.ne.s32.totalorder %s93, %s94
      %p103 = scmp.eq.s32.totalorder %s20, 0
      %p104 = por %p102, %p103
      %p105 = scmp.ne.s32.totalorder %s93, %s94
      %p106 = scmp.eq.s32.totalorder %s21, 1
      %p107 = por %p105, %p106
      %p109 = scmp.ne.s32.totalorder %s94, %s108
      %p110 = scmp.eq.s32.totalorder %s21, 0
      %p111 = por %p109, %p110
      %s113 = sadd.s32 %s112, 1
      %p116 = scmp.eq.s32.totalorder %s15, 1
      %p117 = scmp.ne.s32.totalorder %s112, %s114
      %p118 = scmp.eq.s32.totalorder %s15, 0
      %p119 = por %p117, %p118
      %p120 = scmp.ne.s32.totalorder %s112, %s114
      %p121 = scmp.eq.s32.totalorder %s20, 1
      %p122 = por %p120, %p121
      %p123 = scmp.ne.s32.totalorder %s114, %s115
      %p124 = scmp.eq.s32.totalorder %s20, 0
      %p125 = por %p123, %p124
      %p126 = scmp.ne.s32.totalorder %s114, %s115
      %p127 = scmp.eq.s32.totalorder %s21, 1
      %p128 = por %p126, %p127
      %p130 = scmp.ne.s32.totalorder %s115, %s129
      %p131 = scmp.eq.s32.totalorder %s21, 0
      %p132 = por %p130, %p131
      %s134 = sadd.s32 %s133, 1
      %p137 = scmp.eq.s32.totalorder %s15, 1
      %p138 = scmp.ne.s32.totalorder %s133, %s135
      %p139 = scmp.eq.s32.totalorder %s15, 0
      %p140 = por %p138, %p139
      %p141 = scmp.ne.s32.totalorder %s133, %s135
      %p142 = scmp.eq.s32.totalorder %s20, 1
      %p143 = por %p141, %p142
      %p144 = scmp.ne.s32.totalorder %s135, %s136
      %p145 = scmp.eq.s32.totalorder %s20, 0
      %p146 = por %p144, %p145
      %p147 = scmp.ne.s32.totalorder %s135, %s136
      %p148 = scmp.eq.s32.totalorder %s21, 1
      %p149 = por %p147, %p148
      %p151 = scmp.ne.s32.totalorder %s136, %s150
      %p152 = scmp.eq.s32.totalorder %s21, 0
      %p153 = por %p151, %p152
      %s154 = ssub.s32 %s15, %s22
      %p155 = scmp.eq.s32.totalorder %s154, 0
      %s157 = sadd.s32 %s156, 1
      %s158 = scalar_select %p155, %s156, %s157
      %p161 = pneg %p155
      %p162 = scmp.eq.s32.totalorder %s15, 1
      %p163 = por %p161, %p162
      %p164 = scmp.ne.s32.totalorder %s156, %s159
      %p165 = scmp.eq.s32.totalorder %s15, 0
      %p166 = por %p164, %p165
      %p167 = scmp.ne.s32.totalorder %s156, %s159
      %p168 = scmp.eq.s32.totalorder %s20, 1
      %p169 = por %p167, %p168
      %p170 = scmp.ne.s32.totalorder %s159, %s160
      %p171 = scmp.eq.s32.totalorder %s20, 0
      %p172 = por %p170, %p171
      %p173 = scmp.ne.s32.totalorder %s159, %s160
      %p174 = scmp.eq.s32.totalorder %s21, 1
      %p175 = por %p173, %p174
      %p177 = scmp.ne.s32.totalorder %s160, %s176
      %p178 = scmp.eq.s32.totalorder %s21, 0
      %p179 = por %p177, %p178
      %p180 = scmp.le.s32.totalorder 1, %s15
      %p181 = scmp.lt.s32.totalorder %s15, 3
      %p182 = pnand %p180, %p181
      %p183 = pneg %p182
      // Predicated region
      $region9: #{lenet5_forward.1} parent=5 // pred_check
        _
      $region10: #{lenet5_forward.1} parent=5 // pred_check_branch
        %185 = sbr.rel (%p182) target = $region12
      $region11: #{lenet5_forward.1} parent=5 // pred_region
        %s186 = ssub.s32 %s15, 1
        // Predicated region
        $region13: #{lenet5_forward.1} parent=11 // pred_check
          %p187 = pneg %p62
        $region14: #{lenet5_forward.1} parent=11 // pred_check_branch
          %189 = sbr.rel (%p187) target = $region16
        $region15: #{lenet5_forward.1} parent=11 // pred_region
          _
        $region16: #{lenet5_forward.1} parent=11 // pred_fallthru
          _
        // Predicated region
        $region17: #{lenet5_forward.1} parent=11 // pred_check
          %p190 = pneg %p83
        $region18: #{lenet5_forward.1} parent=11 // pred_check_branch
          %192 = sbr.rel (%p190) target = $region20
        $region19: #{lenet5_forward.1} parent=11 // pred_region
          _
        $region20: #{lenet5_forward.1} parent=11 // pred_fallthru
          _
        // Predicated region
        $region21: #{lenet5_forward.1} parent=11 // pred_check
          %p193 = pneg %p104
        $region22: #{lenet5_forward.1} parent=11 // pred_check_branch
          %195 = sbr.rel (%p193) target = $region24
        $region23: #{lenet5_forward.1} parent=11 // pred_region
          _
        $region24: #{lenet5_forward.1} parent=11 // pred_fallthru
          _
        // Predicated region
        $region25: #{lenet5_forward.1} parent=11 // pred_check
          %p196 = pneg %p125
        $region26: #{lenet5_forward.1} parent=11 // pred_check_branch
          %198 = sbr.rel (%p196) target = $region28
        $region27: #{lenet5_forward.1} parent=11 // pred_region
          _
        $region28: #{lenet5_forward.1} parent=11 // pred_fallthru
          _
        // Predicated region
        $region29: #{lenet5_forward.1} parent=11 // pred_check
          %p199 = pneg %p146
        $region30: #{lenet5_forward.1} parent=11 // pred_check_branch
          %201 = sbr.rel (%p199) target = $region32
        $region31: #{lenet5_forward.1} parent=11 // pred_region
          _
        $region32: #{lenet5_forward.1} parent=11 // pred_fallthru
          _
      $region12: #{lenet5_forward.1} parent=5 // pred_fallthru
        _
      %p202 = scmp.lt.s32.totalorder %s15, 2
      // Predicated region
      $region33: #{lenet5_forward.1} parent=5 // pred_check
        %p203 = pneg %p202
      $region34: #{lenet5_forward.1} parent=5 // pred_check_branch
        %205 = sbr.rel (%p203) target = $region36
      $region35: #{lenet5_forward.1} parent=5 // pred_region
        // Predicated region
        $region37: #{lenet5_forward.1} parent=35 // pred_check
          %p206 = pneg %p35
        $region38: #{lenet5_forward.1} parent=35 // pred_check_branch
          %208 = sbr.rel (%p206) target = $region40
        $region39: #{lenet5_forward.1} parent=35 // pred_region
          %p209 = scmp.lt.s32.totalorder %s15, 1
          %s210 = scalar_select %p209, %s15, 1
          %s211 = smul.addr %s210, 4
          %s212 = smul.addr %s211, 4
          %s213 = scalar_lea.vmem %s0, %s212
        $region40: #{lenet5_forward.1} parent=35 // pred_fallthru
          _
      $region36: #{lenet5_forward.1} parent=5 // pred_fallthru
        _
      %p214 = scmp.le.s32.totalorder 1, %s15
      %p215 = scmp.lt.s32.totalorder %s15, 3
      %p216 = pnand %p214, %p215
      %p217 = pneg %p216
      // Predicated region
      $region41: #{lenet5_forward.1} parent=5 // pred_check
        _
      $region42: #{lenet5_forward.1} parent=5 // pred_check_branch
        %219 = sbr.rel (%p216) target = $region44
      $region43: #{lenet5_forward.1} parent=5 // pred_region
        %s220 = ssub.s32 %s15, 1
        %p221 = scmp.lt.s32.totalorder %s20, 1
        %s222 = scalar_select %p221, %s20, 1
        %s223 = smul.addr %s222, 4
        %s224 = smul.addr %s223, 4
        %s225 = scalar_lea.vmem %s0, %s224
        %p226 = pneg %p41
        %p227 = pneg %p38
        %p228 = pneg %p62
        %p229 = pneg %p59
        %p230 = pneg %p83
        %p231 = pneg %p80
        %p232 = pneg %p104
        %p233 = pneg %p101
        %p234 = pneg %p125
        %p235 = pneg %p122
        %p236 = pneg %p146
        %p237 = pneg %p143
        %p238 = pneg %p172
        %p239 = pneg %p169
        %s240 = sand.u32 %s159, 1
        %s241 = scalar_lea.sflag [#allocation4], %s240
        %s242 = sand.u32 %s159, 1
        %s243 = scalar_lea.vmem [#allocation3], %s242
        %p244 = scmp.lt.s32.totalorder %s20, 1
        %s245 = scalar_select %p244, %s20, 1
        %s246 = smul.addr %s245, 4
        %s247 = smul.addr %s246, 4
        %s248 = scalar_lea.vmem %s0, %s247
        %v250 = vld [vmem:[%s248] sm:$0xf]
        %v251 = vld [vmem:[%s248 + $0x4] sm:$0x7]
        %v252 = vld [vmem:[%s1] sm:$0xff]
        %v253 = vld [vmem:[%s1 + $0x8] sm:$0xff]
        %v254 = vld [vmem:[%s1 + $0x10] sm:$0xff]
        %v255 = vld [vmem:[%s1 + $0x18] sm:$0xff]
        %v256 = vld [vmem:[%s1 + $0x20] sm:$0xff]
        %v257 = vld [vmem:[%s1 + $0x28] sm:$0xff]
        %v258 = vld [vmem:[%s1 + $0x30] sm:$0xff]
        %v259 = vld [vmem:[%s1 + $0x38] sm:$0xff]
        %v260 = vld [vmem:[%s1 + $0x40] sm:$0xff]
        %v261 = vld [vmem:[%s1 + $0x48] sm:$0xff]
        %v262 = vld [vmem:[%s1 + $0x50] sm:$0xff]
        %v263 = vld [vmem:[%s1 + $0x58] sm:$0xff]
        %v264 = vld [vmem:[%s1 + $0x60] sm:$0xff]
        %v265 = vld [vmem:[%s1 + $0x68] sm:$0xff]
        %v266 = vld [vmem:[%s1 + $0x70] sm:$0xff]
        %v267 = vld [vmem:[%s1 + $0x78] sm:$0xff]
        %s268 = scalar_lea.vmem %s248, 8
        %v269 = vld [vmem:[%s268] sm:$0xf]
        %v270 = vld [vmem:[%s268 + $0x4] sm:$0x7]
        %s271 = scalar_lea.vmem %s1, 128
        %v272 = vld [vmem:[%s271] sm:$0xff]
        %v273 = vld [vmem:[%s271 + $0x8] sm:$0xff]
        %v274 = vld [vmem:[%s271 + $0x10] sm:$0xff]
        %v275 = vld [vmem:[%s271 + $0x18] sm:$0xff]
        %v276 = vld [vmem:[%s271 + $0x20] sm:$0xff]
        %v277 = vld [vmem:[%s271 + $0x28] sm:$0xff]
        %v278 = vld [vmem:[%s271 + $0x30] sm:$0xff]
        %v279 = vld [vmem:[%s271 + $0x38] sm:$0xff]
        %v280 = vld [vmem:[%s271 + $0x40] sm:$0xff]
        %v281 = vld [vmem:[%s271 + $0x48] sm:$0xff]
        %v282 = vld [vmem:[%s271 + $0x50] sm:$0xff]
        %v283 = vld [vmem:[%s271 + $0x58] sm:$0xff]
        %v284 = vld [vmem:[%s271 + $0x60] sm:$0xff]
        %v285 = vld [vmem:[%s271 + $0x68] sm:$0xff]
        %v286 = vld [vmem:[%s271 + $0x70] sm:$0xff]
        %v287 = vld [vmem:[%s271 + $0x78] sm:$0xff]
        %v290 = vunpack.c.l.b16 %v269
        %v291 = vunpack.c.l.b16 %v270
        %v292 = vpack.c.b16 %v291, %v290
        %v310 = vunpack.c.l.b16 %v272
        %v311 = vunpack.c.h.b16 %v272
        %v312 = vunpack.c.l.b16 %v273
        %v313 = vunpack.c.h.b16 %v273
        %v314 = vunpack.c.l.b16 %v274
        %v315 = vunpack.c.h.b16 %v274
        %v316 = vunpack.c.l.b16 %v275
        %v317 = vunpack.c.h.b16 %v275
        %v318 = vunpack.c.l.b16 %v276
        %v319 = vunpack.c.h.b16 %v276
        %v320 = vunpack.c.l.b16 %v277
        %v321 = vunpack.c.h.b16 %v277
        %v322 = vunpack.c.l.b16 %v278
        %v323 = vunpack.c.h.b16 %v278
        %v324 = vunpack.c.l.b16 %v279
        %v325 = vunpack.c.h.b16 %v279
        %v326 = vunpack.c.l.b16 %v280
        %v327 = vunpack.c.h.b16 %v280
        %v328 = vunpack.c.l.b16 %v281
        %v329 = vunpack.c.h.b16 %v281
        %v330 = vunpack.c.l.b16 %v282
        %v331 = vunpack.c.h.b16 %v282
        %v332 = vunpack.c.l.b16 %v283
        %v333 = vunpack.c.h.b16 %v283
        %v334 = vunpack.c.l.b16 %v284
        %v335 = vunpack.c.h.b16 %v284
        %v336 = vunpack.c.l.b16 %v285
        %v337 = vunpack.c.h.b16 %v285
        %v338 = vunpack.c.l.b16 %v286
        %v339 = vunpack.c.h.b16 %v286
        %v340 = vunpack.c.l.b16 %v287
        %v341 = vunpack.c.h.b16 %v287
        %v342 = vpack.c.b16 %v312, %v310
        %v343 = vpack.c.b16 %v313, %v311
        %v344 = vpack.c.b16 %v316, %v314
        %v345 = vpack.c.b16 %v317, %v315
        %v346 = vpack.c.b16 %v320, %v318
        %v347 = vpack.c.b16 %v321, %v319
        %v348 = vpack.c.b16 %v324, %v322
        %v349 = vpack.c.b16 %v325, %v323
        %v350 = vpack.c.b16 %v328, %v326
        %v351 = vpack.c.b16 %v329, %v327
        %v352 = vpack.c.b16 %v332, %v330
        %v353 = vpack.c.b16 %v333, %v331
        %v354 = vpack.c.b16 %v336, %v334
        %v355 = vpack.c.b16 %v337, %v335
        %v356 = vpack.c.b16 %v340, %v338
        %v357 = vpack.c.b16 %v341, %v339
        %374 = vmatprep.subr.bf16.mxu0 %v343
        %375 = vmatpush1.bf16.msra.mxu0 %v342
        %376 = vmatprep.subr.bf16.mxu0 %v345
        %377 = vmatpush1.bf16.msra.mxu0 %v344
        %378 = vmatprep.subr.bf16.mxu0 %v347
        %379 = vmatpush1.bf16.msra.mxu0 %v346
        %380 = vmatprep.subr.bf16.mxu0 %v349
        %381 = vmatpush1.bf16.msra.mxu0 %v348
        %382 = vmatprep.subr.bf16.mxu0 %v351
        %383 = vmatpush1.bf16.msra.mxu0 %v350
        %384 = vmatprep.subr.bf16.mxu0 %v353
        %385 = vmatpush1.bf16.msra.mxu0 %v352
        %386 = vmatprep.subr.bf16.mxu0 %v355
        %387 = vmatpush1.bf16.msra.mxu0 %v354
        %388 = vmatprep.subr.bf16.mxu0 %v357
        %389 = vmatpush1.bf16.msra.mxu0 %v356
        %390 = vmatprep.subr.bf16.mxu0 0
        %391 = vmatpush1.bf16.msra.mxu0 0
        %392 = vmatprep.subr.bf16.mxu0 0
        %393 = vmatpush1.bf16.msra.mxu0 0
        %394 = vmatprep.subr.bf16.mxu0 0
        %395 = vmatpush1.bf16.msra.mxu0 0
        %396 = vmatprep.subr.bf16.mxu0 0
        %397 = vmatpush1.bf16.msra.mxu0 0
        %398 = vmatprep.subr.bf16.mxu0 0
        %399 = vmatpush1.bf16.msra.mxu0 0
        %400 = vmatprep.subr.bf16.mxu0 0
        %401 = vmatpush1.bf16.msra.mxu0 0
        %402 = vmatprep.subr.bf16.mxu0 0
        %403 = vmatpush1.bf16.msra.mxu0 0
        %404 = vmatprep.subr.bf16.mxu0 0
        %405 = vmatpush1.bf16.msra.mxu0 0
        %406 = vmatprep.mubr.bf16.mxu0 0
        %407 = vmatmul.mubr.bf16.gmra.mrb[0].mxu0 %v292
        %v408 = vpop.f32.mrb[0].mxu0
        %v409 = vadd.f32 0.0, %v408
        %v410 = vpop.f32.mrb[0].mxu0
        %v411 = vadd.f32 0.0, %v410
        %v412 = vpop.f32.mrb[0].mxu0
        %v413 = vadd.f32 0.0, %v412
        %v414 = vpop.f32.mrb[0].mxu0
        %v415 = vadd.f32 0.0, %v414
        %416 = vdwg.mxu0
        %v419 = vunpack.c.l.b16 %v250
        %v420 = vunpack.c.l.b16 %v251
        %v421 = vpack.c.b16 %v420, %v419
        %v439 = vunpack.c.l.b16 %v252
        %v440 = vunpack.c.h.b16 %v252
        %v441 = vunpack.c.l.b16 %v253
        %v442 = vunpack.c.h.b16 %v253
        %v443 = vunpack.c.l.b16 %v254
        %v444 = vunpack.c.h.b16 %v254
        %v445 = vunpack.c.l.b16 %v255
        %v446 = vunpack.c.h.b16 %v255
        %v447 = vunpack.c.l.b16 %v256
        %v448 = vunpack.c.h.b16 %v256
        %v449 = vunpack.c.l.b16 %v257
        %v450 = vunpack.c.h.b16 %v257
        %v451 = vunpack.c.l.b16 %v258
        %v452 = vunpack.c.h.b16 %v258
        %v453 = vunpack.c.l.b16 %v259
        %v454 = vunpack.c.h.b16 %v259
        %v455 = vunpack.c.l.b16 %v260
        %v456 = vunpack.c.h.b16 %v260
        %v457 = vunpack.c.l.b16 %v261
        %v458 = vunpack.c.h.b16 %v261
        %v459 = vunpack.c.l.b16 %v262
        %v460 = vunpack.c.h.b16 %v262
        %v461 = vunpack.c.l.b16 %v263
        %v462 = vunpack.c.h.b16 %v263
        %v463 = vunpack.c.l.b16 %v264
        %v464 = vunpack.c.h.b16 %v264
        %v465 = vunpack.c.l.b16 %v265
        %v466 = vunpack.c.h.b16 %v265
        %v467 = vunpack.c.l.b16 %v266
        %v468 = vunpack.c.h.b16 %v266
        %v469 = vunpack.c.l.b16 %v267
        %v470 = vunpack.c.h.b16 %v267
        %v471 = vpack.c.b16 %v441, %v439
        %v472 = vpack.c.b16 %v442, %v440
        %v473 = vpack.c.b16 %v445, %v443
        %v474 = vpack.c.b16 %v446, %v444
        %v475 = vpack.c.b16 %v449, %v447
        %v476 = vpack.c.b16 %v450, %v448
        %v477 = vpack.c.b16 %v453, %v451
        %v478 = vpack.c.b16 %v454, %v452
        %v479 = vpack.c.b16 %v457, %v455
        %v480 = vpack.c.b16 %v458, %v456
        %v481 = vpack.c.b16 %v461, %v459
        %v482 = vpack.c.b16 %v462, %v460
        %v483 = vpack.c.b16 %v465, %v463
        %v484 = vpack.c.b16 %v466, %v464
        %v485 = vpack.c.b16 %v469, %v467
        %v486 = vpack.c.b16 %v470, %v468
        %503 = vmatprep.subr.bf16.mxu0 %v472
        %504 = vmatpush1.bf16.msra.mxu0 %v471
        %505 = vmatprep.subr.bf16.mxu0 %v474
        %506 = vmatpush1.bf16.msra.mxu0 %v473
        %507 = vmatprep.subr.bf16.mxu0 %v476
        %508 = vmatpush1.bf16.msra.mxu0 %v475
        %509 = vmatprep.subr.bf16.mxu0 %v478
        %510 = vmatpush1.bf16.msra.mxu0 %v477
        %511 = vmatprep.subr.bf16.mxu0 %v480
        %512 = vmatpush1.bf16.msra.mxu0 %v479
        %513 = vmatprep.subr.bf16.mxu0 %v482
        %514 = vmatpush1.bf16.msra.mxu0 %v481
        %515 = vmatprep.subr.bf16.mxu0 %v484
        %516 = vmatpush1.bf16.msra.mxu0 %v483
        %517 = vmatprep.subr.bf16.mxu0 %v486
        %518 = vmatpush1.bf16.msra.mxu0 %v485
        %519 = vmatprep.subr.bf16.mxu0 0
        %520 = vmatpush1.bf16.msra.mxu0 0
        %521 = vmatprep.subr.bf16.mxu0 0
        %522 = vmatpush1.bf16.msra.mxu0 0
        %523 = vmatprep.subr.bf16.mxu0 0
        %524 = vmatpush1.bf16.msra.mxu0 0
        %525 = vmatprep.subr.bf16.mxu0 0
        %526 = vmatpush1.bf16.msra.mxu0 0
        %527 = vmatprep.subr.bf16.mxu0 0
        %528 = vmatpush1.bf16.msra.mxu0 0
        %529 = vmatprep.subr.bf16.mxu0 0
        %530 = vmatpush1.bf16.msra.mxu0 0
        %531 = vmatprep.subr.bf16.mxu0 0
        %532 = vmatpush1.bf16.msra.mxu0 0
        %533 = vmatprep.subr.bf16.mxu0 0
        %534 = vmatpush1.bf16.msra.mxu0 0
        %535 = vmatprep.mubr.bf16.mxu0 0
        %536 = vmatmul.mubr.bf16.gmra.mrb[0].mxu0 %v421
        %v537 = vpop.f32.mrb[0].mxu0
        %v538 = vadd.f32 %v409, %v537
        %v539 = vpop.f32.mrb[0].mxu0
        %v540 = vadd.f32 %v411, %v539
        %v541 = vpop.f32.mrb[0].mxu0
        %v542 = vadd.f32 %v413, %v541
        %v543 = vpop.f32.mrb[0].mxu0
        %v544 = vadd.f32 %v415, %v543
        %545 = vdwg.mxu0
        %v546 = vld [vmem:[%s248 + $0x4] sm:$0xf]
        %s547 = scalar_lea.vmem %s1, 256
        %v548 = vld [vmem:[%s547] sm:$0xff]
        %v549 = vld [vmem:[%s547 + $0x8] sm:$0xff]
        %v550 = vld [vmem:[%s547 + $0x10] sm:$0xff]
        %v551 = vld [vmem:[%s547 + $0x18] sm:$0xff]
        %v552 = vld [vmem:[%s547 + $0x20] sm:$0xff]
        %v553 = vld [vmem:[%s547 + $0x28] sm:$0xff]
        %v554 = vld [vmem:[%s547 + $0x30] sm:$0xff]
        %v555 = vld [vmem:[%s547 + $0x38] sm:$0xff]
        %v556 = vld [vmem:[%s547 + $0x40] sm:$0xff]
        %v557 = vld [vmem:[%s547 + $0x48] sm:$0xff]
        %v558 = vld [vmem:[%s547 + $0x50] sm:$0xff]
        %v559 = vld [vmem:[%s547 + $0x58] sm:$0xff]
        %v560 = vld [vmem:[%s547 + $0x60] sm:$0xff]
        %v561 = vld [vmem:[%s547 + $0x68] sm:$0xff]
        %v562 = vld [vmem:[%s547 + $0x70] sm:$0xff]
        %v563 = vld [vmem:[%s547 + $0x78] sm:$0xff]
        %v565 = vunpack.c.l.b16 %v546
        %v566 = vpack.c.b16 %v565, %v419
        %v568 = vshrl.u32 %v566, 16
        %v570 = vshll.u32 %v566, 16
        %v572 = vrot.slane %v570, 1
        %v573 = vor.u32 %v568, %v572
        %v591 = vunpack.c.l.b16 %v548
        %v592 = vunpack.c.h.b16 %v548
        %v593 = vunpack.c.l.b16 %v549
        %v594 = vunpack.c.h.b16 %v549
        %v595 = vunpack.c.l.b16 %v550
        %v596 = vunpack.c.h.b16 %v550
        %v597 = vunpack.c.l.b16 %v551
        %v598 = vunpack.c.h.b16 %v551
        %v599 = vunpack.c.l.b16 %v552
        %v600 = vunpack.c.h.b16 %v552
        %v601 = vunpack.c.l.b16 %v553
        %v602 = vunpack.c.h.b16 %v553
        %v603 = vunpack.c.l.b16 %v554
        %v604 = vunpack.c.h.b16 %v554
        %v605 = vunpack.c.l.b16 %v555
        %v606 = vunpack.c.h.b16 %v555
        %v607 = vunpack.c.l.b16 %v556
        %v608 = vunpack.c.h.b16 %v556
        %v609 = vunpack.c.l.b16 %v557
        %v610 = vunpack.c.h.b16 %v557
        %v611 = vunpack.c.l.b16 %v558
        %v612 = vunpack.c.h.b16 %v558
        %v613 = vunpack.c.l.b16 %v559
        %v614 = vunpack.c.h.b16 %v559
        %v615 = vunpack.c.l.b16 %v560
        %v616 = vunpack.c.h.b16 %v560
        %v617 = vunpack.c.l.b16 %v561
        %v618 = vunpack.c.h.b16 %v561
        %v619 = vunpack.c.l.b16 %v562
        %v620 = vunpack.c.h.b16 %v562
        %v621 = vunpack.c.l.b16 %v563
        %v622 = vunpack.c.h.b16 %v563
        %v623 = vpack.c.b16 %v593, %v591
        %v624 = vpack.c.b16 %v594, %v592
        %v625 = vpack.c.b16 %v597, %v595
        %v626 = vpack.c.b16 %v598, %v596
        %v627 = vpack.c.b16 %v601, %v599
        %v628 = vpack.c.b16 %v602, %v600
        %v629 = vpack.c.b16 %v605, %v603
        %v630 = vpack.c.b16 %v606, %v604
        %v631 = vpack.c.b16 %v609, %v607
        %v632 = vpack.c.b16 %v610, %v608
        %v633 = vpack.c.b16 %v613, %v611
        %v634 = vpack.c.b16 %v614, %v612
        %v635 = vpack.c.b16 %v617, %v615
        %v636 = vpack.c.b16 %v618, %v616
        %v637 = vpack.c.b16 %v621, %v619
        %v638 = vpack.c.b16 %v622, %v620
        %655 = vmatprep.subr.bf16.mxu0 %v624
        %656 = vmatpush1.bf16.msra.mxu0 %v623
        %657 = vmatprep.subr.bf16.mxu0 %v626
        %658 = vmatpush1.bf16.msra.mxu0 %v625
        %659 = vmatprep.subr.bf16.mxu0 %v628
        %660 = vmatpush1.bf16.msra.mxu0 %v627
        %661 = vmatprep.subr.bf16.mxu0 %v630
        %662 = vmatpush1.bf16.msra.mxu0 %v629
        %663 = vmatprep.subr.bf16.mxu0 %v632
        %664 = vmatpush1.bf16.msra.mxu0 %v631
        %665 = vmatprep.subr.bf16.mxu0 %v634
        %666 = vmatpush1.bf16.msra.mxu0 %v633
        %667 = vmatprep.subr.bf16.mxu0 %v636
        %668 = vmatpush1.bf16.msra.mxu0 %v635
        %669 = vmatprep.subr.bf16.mxu0 %v638
        %670 = vmatpush1.bf16.msra.mxu0 %v637
        %671 = vmatprep.subr.bf16.mxu0 0
        %672 = vmatpush1.bf16.msra.mxu0 0
        %673 = vmatprep.subr.bf16.mxu0 0
        %674 = vmatpush1.bf16.msra.mxu0 0
        %675 = vmatprep.subr.bf16.mxu0 0
        %676 = vmatpush1.bf16.msra.mxu0 0
        %677 = vmatprep.subr.bf16.mxu0 0
        %678 = vmatpush1.bf16.msra.mxu0 0
        %679 = vmatprep.subr.bf16.mxu0 0
        %680 = vmatpush1.bf16.msra.mxu0 0
        %681 = vmatprep.subr.bf16.mxu0 0
        %682 = vmatpush1.bf16.msra.mxu0 0
        %683 = vmatprep.subr.bf16.mxu0 0
        %684 = vmatpush1.bf16.msra.mxu0 0
        %685 = vmatprep.subr.bf16.mxu0 0
        %686 = vmatpush1.bf16.msra.mxu0 0
        %687 = vmatprep.mubr.bf16.mxu0 0
        %688 = vmatmul.mubr.bf16.gmra.mrb[0].mxu0 %v573
        %v689 = vpop.f32.mrb[0].mxu0
        %v690 = vadd.f32 0.0, %v689
        %v691 = vpop.f32.mrb[0].mxu0
        %v692 = vadd.f32 0.0, %v691
        %v693 = vpop.f32.mrb[0].mxu0
        %v694 = vadd.f32 0.0, %v693
        %v695 = vpop.f32.mrb[0].mxu0
        %v696 = vadd.f32 0.0, %v695
        %697 = vdwg.mxu0
        %v698 = vadd.f32 %v538, %v690
        %v699 = vadd.f32 %v540, %v692
        %v700 = vadd.f32 %v542, %v694
        %v701 = vadd.f32 %v544, %v696
        %v702 = vld [vmem:[%s268 + $0x4] sm:$0xf]
        %s703 = scalar_lea.vmem %s1, 384
        %v704 = vld [vmem:[%s703] sm:$0xff]
        %v705 = vld [vmem:[%s703 + $0x8] sm:$0xff]
        %v706 = vld [vmem:[%s703 + $0x10] sm:$0xff]
        %v707 = vld [vmem:[%s703 + $0x18] sm:$0xff]
        %v708 = vld [vmem:[%s703 + $0x20] sm:$0xff]
        %v709 = vld [vmem:[%s703 + $0x28] sm:$0xff]
        %v710 = vld [vmem:[%s703 + $0x30] sm:$0xff]
        %v711 = vld [vmem:[%s703 + $0x38] sm:$0xff]
        %v712 = vld [vmem:[%s703 + $0x40] sm:$0xff]
        %v713 = vld [vmem:[%s703 + $0x48] sm:$0xff]
        %v714 = vld [vmem:[%s703 + $0x50] sm:$0xff]
        %v715 = vld [vmem:[%s703 + $0x58] sm:$0xff]
        %v716 = vld [vmem:[%s703 + $0x60] sm:$0xff]
        %v717 = vld [vmem:[%s703 + $0x68] sm:$0xff]
        %v718 = vld [vmem:[%s703 + $0x70] sm:$0xff]
        %v719 = vld [vmem:[%s703 + $0x78] sm:$0xff]
        %v721 = vunpack.c.l.b16 %v702
        %v722 = vpack.c.b16 %v721, %v290
        %v724 = vshrl.u32 %v722, 16
        %v726 = vshll.u32 %v722, 16
        %v728 = vrot.slane %v726, 1
        %v729 = vor.u32 %v724, %v728
        %v747 = vunpack.c.l.b16 %v704
        %v748 = vunpack.c.h.b16 %v704
        %v749 = vunpack.c.l.b16 %v705
        %v750 = vunpack.c.h.b16 %v705
        %v751 = vunpack.c.l.b16 %v706
        %v752 = vunpack.c.h.b16 %v706
        %v753 = vunpack.c.l.b16 %v707
        %v754 = vunpack.c.h.b16 %v707
        %v755 = vunpack.c.l.b16 %v708
        %v756 = vunpack.c.h.b16 %v708
        %v757 = vunpack.c.l.b16 %v709
        %v758 = vunpack.c.h.b16 %v709
        %v759 = vunpack.c.l.b16 %v710
        %v760 = vunpack.c.h.b16 %v710
        %v761 = vunpack.c.l.b16 %v711
        %v762 = vunpack.c.h.b16 %v711
        %v763 = vunpack.c.l.b16 %v712
        %v764 = vunpack.c.h.b16 %v712
        %v765 = vunpack.c.l.b16 %v713
        %v766 = vunpack.c.h.b16 %v713
        %v767 = vunpack.c.l.b16 %v714
        %v768 = vunpack.c.h.b16 %v714
        %v769 = vunpack.c.l.b16 %v715
        %v770 = vunpack.c.h.b16 %v715
        %v771 = vunpack.c.l.b16 %v716
        %v772 = vunpack.c.h.b16 %v716
        %v773 = vunpack.c.l.b16 %v717
        %v774 = vunpack.c.h.b16 %v717
        %v775 = vunpack.c.l.b16 %v718
        %v776 = vunpack.c.h.b16 %v718
        %v777 = vunpack.c.l.b16 %v719
        %v778 = vunpack.c.h.b16 %v719
        %v779 = vpack.c.b16 %v749, %v747
        %v780 = vpack.c.b16 %v750, %v748
        %v781 = vpack.c.b16 %v753, %v751
        %v782 = vpack.c.b16 %v754, %v752
        %v783 = vpack.c.b16 %v757, %v755
        %v784 = vpack.c.b16 %v758, %v756
        %v785 = vpack.c.b16 %v761, %v759
        %v786 = vpack.c.b16 %v762, %v760
        %v787 = vpack.c.b16 %v765, %v763
        %v788 = vpack.c.b16 %v766, %v764
        %v789 = vpack.c.b16 %v769, %v767
        %v790 = vpack.c.b16 %v770, %v768
        %v791 = vpack.c.b16 %v773, %v771
        %v792 = vpack.c.b16 %v774, %v772
        %v793 = vpack.c.b16 %v777, %v775
        %v794 = vpack.c.b16 %v778, %v776
        %811 = vmatprep.subr.bf16.mxu0 %v780
        %812 = vmatpush1.bf16.msra.mxu0 %v779
        %813 = vmatprep.subr.bf16.mxu0 %v782
        %814 = vmatpush1.bf16.msra.mxu0 %v781
        %815 = vmatprep.subr.bf16.mxu0 %v784
        %816 = vmatpush1.bf16.msra.mxu0 %v783
        %817 = vmatprep.subr.bf16.mxu0 %v786
        %818 = vmatpush1.bf16.msra.mxu0 %v785
        %819 = vmatprep.subr.bf16.mxu0 %v788
        %820 = vmatpush1.bf16.msra.mxu0 %v787
        %821 = vmatprep.subr.bf16.mxu0 %v790
        %822 = vmatpush1.bf16.msra.mxu0 %v789
        %823 = vmatprep.subr.bf16.mxu0 %v792
        %824 = vmatpush1.bf16.msra.mxu0 %v791
        %825 = vmatprep.subr.bf16.mxu0 %v794
        %826 = vmatpush1.bf16.msra.mxu0 %v793
        %827 = vmatprep.subr.bf16.mxu0 0
        %828 = vmatpush1.bf16.msra.mxu0 0
        %829 = vmatprep.subr.bf16.mxu0 0
        %830 = vmatpush1.bf16.msra.mxu0 0
        %831 = vmatprep.subr.bf16.mxu0 0
        %832 = vmatpush1.bf16.msra.mxu0 0
        %833 = vmatprep.subr.bf16.mxu0 0
        %834 = vmatpush1.bf16.msra.mxu0 0
        %835 = vmatprep.subr.bf16.mxu0 0
        %836 = vmatpush1.bf16.msra.mxu0 0
        %837 = vmatprep.subr.bf16.mxu0 0
        %838 = vmatpush1.bf16.msra.mxu0 0
        %839 = vmatprep.subr.bf16.mxu0 0
        %840 = vmatpush1.bf16.msra.mxu0 0
        %841 = vmatprep.subr.bf16.mxu0 0
        %842 = vmatpush1.bf16.msra.mxu0 0
        %843 = vmatprep.mubr.bf16.mxu0 0
        %844 = vmatmul.mubr.bf16.gmra.mrb[0].mxu0 %v729
        %v845 = vpop.f32.mrb[0].mxu0
        %v846 = vadd.f32 0.0, %v845
        %v847 = vpop.f32.mrb[0].mxu0
        %v848 = vadd.f32 0.0, %v847
        %v849 = vpop.f32.mrb[0].mxu0
        %v850 = vadd.f32 0.0, %v849
        %v851 = vpop.f32.mrb[0].mxu0
        %v852 = vadd.f32 0.0, %v851
        %853 = vdwg.mxu0
        %v854 = vadd.f32 %v698, %v846
        %v855 = vadd.f32 %v699, %v848
        %v856 = vadd.f32 %v700, %v850
        %v857 = vadd.f32 %v701, %v852
        %v858 = vld [vmem:[%s248] sm:$0xe]
        %s859 = scalar_lea.vmem %s1, 512
        %v860 = vld [vmem:[%s859] sm:$0xff]
        %v861 = vld [vmem:[%s859 + $0x8] sm:$0xff]
        %v862 = vld [vmem:[%s859 + $0x10] sm:$0xff]
        %v863 = vld [vmem:[%s859 + $0x18] sm:$0xff]
        %v864 = vld [vmem:[%s859 + $0x20] sm:$0xff]
        %v865 = vld [vmem:[%s859 + $0x28] sm:$0xff]
        %v866 = vld [vmem:[%s859 + $0x30] sm:$0xff]
        %v867 = vld [vmem:[%s859 + $0x38] sm:$0xff]
        %v868 = vld [vmem:[%s859 + $0x40] sm:$0xff]
        %v869 = vld [vmem:[%s859 + $0x48] sm:$0xff]
        %v870 = vld [vmem:[%s859 + $0x50] sm:$0xff]
        %v871 = vld [vmem:[%s859 + $0x58] sm:$0xff]
        %v872 = vld [vmem:[%s859 + $0x60] sm:$0xff]
        %v873 = vld [vmem:[%s859 + $0x68] sm:$0xff]
        %v874 = vld [vmem:[%s859 + $0x70] sm:$0xff]
        %v875 = vld [vmem:[%s859 + $0x78] sm:$0xff]
        %v877 = vunpack.c.l.b16 %v858
        %v878 = vpack.c.b16 %v565, %v877
        %v879 = vrot.slane %v878, 1
        %v897 = vunpack.c.l.b16 %v860
        %v898 = vunpack.c.h.b16 %v860
        %v899 = vunpack.c.l.b16 %v861
        %v900 = vunpack.c.h.b16 %v861
        %v901 = vunpack.c.l.b16 %v862
        %v902 = vunpack.c.h.b16 %v862
        %v903 = vunpack.c.l.b16 %v863
        %v904 = vunpack.c.h.b16 %v863
        %v905 = vunpack.c.l.b16 %v864
        %v906 = vunpack.c.h.b16 %v864
        %v907 = vunpack.c.l.b16 %v865
        %v908 = vunpack.c.h.b16 %v865
        %v909 = vunpack.c.l.b16 %v866
        %v910 = vunpack.c.h.b16 %v866
        %v911 = vunpack.c.l.b16 %v867
        %v912 = vunpack.c.h.b16 %v867
        %v913 = vunpack.c.l.b16 %v868
        %v914 = vunpack.c.h.b16 %v868
        %v915 = vunpack.c.l.b16 %v869
        %v916 = vunpack.c.h.b16 %v869
        %v917 = vunpack.c.l.b16 %v870
        %v918 = vunpack.c.h.b16 %v870
        %v919 = vunpack.c.l.b16 %v871
        %v920 = vunpack.c.h.b16 %v871
        %v921 = vunpack.c.l.b16 %v872
        %v922 = vunpack.c.h.b16 %v872
        %v923 = vunpack.c.l.b16 %v873
        %v924 = vunpack.c.h.b16 %v873
        %v925 = vunpack.c.l.b16 %v874
        %v926 = vunpack.c.h.b16 %v874
        %v927 = vunpack.c.l.b16 %v875
        %v928 = vunpack.c.h.b16 %v875
        %v929 = vpack.c.b16 %v899, %v897
        %v930 = vpack.c.b16 %v900, %v898
        %v931 = vpack.c.b16 %v903, %v901
        %v932 = vpack.c.b16 %v904, %v902
        %v933 = vpack.c.b16 %v907, %v905
        %v934 = vpack.c.b16 %v908, %v906
        %v935 = vpack.c.b16 %v911, %v909
        %v936 = vpack.c.b16 %v912, %v910
        %v937 = vpack.c.b16 %v915, %v913
        %v938 = vpack.c.b16 %v916, %v914
        %v939 = vpack.c.b16 %v919, %v917
        %v940 = vpack.c.b16 %v920, %v918
        %v941 = vpack.c.b16 %v923, %v921
        %v942 = vpack.c.b16 %v924, %v922
        %v943 = vpack.c.b16 %v927, %v925
        %v944 = vpack.c.b16 %v928, %v926
        %961 = vmatprep.subr.bf16.mxu0 %v930
        %962 = vmatpush1.bf16.msra.mxu0 %v929
        %963 = vmatprep.subr.bf16.mxu0 %v932
        %964 = vmatpush1.bf16.msra.mxu0 %v931
        %965 = vmatprep.subr.bf16.mxu0 %v934
        %966 = vmatpush1.bf16.msra.mxu0 %v933
        %967 = vmatprep.subr.bf16.mxu0 %v936
        %968 = vmatpush1.bf16.msra.mxu0 %v935
        %969 = vmatprep.subr.bf16.mxu0 %v938
        %970 = vmatpush1.bf16.msra.mxu0 %v937
        %971 = vmatprep.subr.bf16.mxu0 %v940
        %972 = vmatpush1.bf16.msra.mxu0 %v939
        %973 = vmatprep.subr.bf16.mxu0 %v942
        %974 = vmatpush1.bf16.msra.mxu0 %v941
        %975 = vmatprep.subr.bf16.mxu0 %v944
        %976 = vmatpush1.bf16.msra.mxu0 %v943
        %977 = vmatprep.subr.bf16.mxu0 0
        %978 = vmatpush1.bf16.msra.mxu0 0
        %979 = vmatprep.subr.bf16.mxu0 0
        %980 = vmatpush1.bf16.msra.mxu0 0
        %981 = vmatprep.subr.bf16.mxu0 0
        %982 = vmatpush1.bf16.msra.mxu0 0
        %983 = vmatprep.subr.bf16.mxu0 0
        %984 = vmatpush1.bf16.msra.mxu0 0
        %985 = vmatprep.subr.bf16.mxu0 0
        %986 = vmatpush1.bf16.msra.mxu0 0
        %987 = vmatprep.subr.bf16.mxu0 0
        %988 = vmatpush1.bf16.msra.mxu0 0
        %989 = vmatprep.subr.bf16.mxu0 0
        %990 = vmatpush1.bf16.msra.mxu0 0
        %991 = vmatprep.subr.bf16.mxu0 0
        %992 = vmatpush1.bf16.msra.mxu0 0
        %993 = vmatprep.mubr.bf16.mxu0 0
        %994 = vmatmul.mubr.bf16.gmra.mrb[0].mxu0 %v879
        %v995 = vpop.f32.mrb[0].mxu0
        %v996 = vadd.f32 0.0, %v995
        %v997 = vpop.f32.mrb[0].mxu0
        %v998 = vadd.f32 0.0, %v997
        %v999 = vpop.f32.mrb[0].mxu0
        %v1000 = vadd.f32 0.0, %v999
        %v1001 = vpop.f32.mrb[0].mxu0
        %v1002 = vadd.f32 0.0, %v1001
        %1003 = vdwg.mxu0
        %v1004 = vadd.f32 %v854, %v996
        %v1005 = vadd.f32 %v855, %v998
        %v1006 = vadd.f32 %v856, %v1000
        %v1007 = vadd.f32 %v857, %v1002
        %1008 = vmatprep.subr.bf16.mxu0 %v343
        %1009 = vmatpush1.bf16.msra.mxu0 %v342
        %1010 = vmatprep.subr.bf16.mxu0 %v345
        %1011 = vmatpush1.bf16.msra.mxu0 %v344
        %1012 = vmatprep.subr.bf16.mxu0 %v347
        %1013 = vmatpush1.bf16.msra.mxu0 %v346
        %1014 = vmatprep.subr.bf16.mxu0 %v349
        %1015 = vmatpush1.bf16.msra.mxu0 %v348
        %1016 = vmatprep.subr.bf16.mxu0 %v351
        %1017 = vmatpush1.bf16.msra.mxu0 %v350
        %1018 = vmatprep.subr.bf16.mxu0 %v353
        %1019 = vmatpush1.bf16.msra.mxu0 %v352
        %1020 = vmatprep.subr.bf16.mxu0 %v355
        %1021 = vmatpush1.bf16.msra.mxu0 %v354
        %1022 = vmatprep.subr.bf16.mxu0 %v357
        %1023 = vmatpush1.bf16.msra.mxu0 %v356
        %1024 = vmatprep.subr.bf16.mxu0 0
        %1025 = vmatpush1.bf16.msra.mxu0 0
        %1026 = vmatprep.subr.bf16.mxu0 0
        %1027 = vmatpush1.bf16.msra.mxu0 0
        %1028 = vmatprep.subr.bf16.mxu0 0
        %1029 = vmatpush1.bf16.msra.mxu0 0
        %1030 = vmatprep.subr.bf16.mxu0 0
        %1031 = vmatpush1.bf16.msra.mxu0 0
        %1032 = vmatprep.subr.bf16.mxu0 0
        %1033 = vmatpush1.bf16.msra.mxu0 0
        %1034 = vmatprep.subr.bf16.mxu0 0
        %1035 = vmatpush1.bf16.msra.mxu0 0
        %1036 = vmatprep.subr.bf16.mxu0 0
        %1037 = vmatpush1.bf16.msra.mxu0 0
        %1038 = vmatprep.subr.bf16.mxu0 0
        %1039 = vmatpush1.bf16.msra.mxu0 0
        %1040 = vmatprep.mubr.bf16.mxu0 0
        %1041 = vmatmul.mubr.bf16.gmra.mrb[0].mxu0 %v573
        %v1042 = vpop.f32.mrb[0].mxu0
        %v1043 = vadd.f32 0.0, %v1042
        %v1044 = vpop.f32.mrb[0].mxu0
        %v1045 = vadd.f32 0.0, %v1044
        %v1046 = vpop.f32.mrb[0].mxu0
        %v1047 = vadd.f32 0.0, %v1046
        %v1048 = vpop.f32.mrb[0].mxu0
        %v1049 = vadd.f32 0.0, %v1048
        %1050 = vdwg.mxu0
        %1051 = vmatprep.subr.bf16.mxu0 %v472
        %1052 = vmatpush1.bf16.msra.mxu0 %v471
        %1053 = vmatprep.subr.bf16.mxu0 %v474
        %1054 = vmatpush1.bf16.msra.mxu0 %v473
        %1055 = vmatprep.subr.bf16.mxu0 %v476
        %1056 = vmatpush1.bf16.msra.mxu0 %v475
        %1057 = vmatprep.subr.bf16.mxu0 %v478
        %1058 = vmatpush1.bf16.msra.mxu0 %v477
        %1059 = vmatprep.subr.bf16.mxu0 %v480
        %1060 = vmatpush1.bf16.msra.mxu0 %v479
        %1061 = vmatprep.subr.bf16.mxu0 %v482
        %1062 = vmatpush1.bf16.msra.mxu0 %v481
        %1063 = vmatprep.subr.bf16.mxu0 %v484
        %1064 = vmatpush1.bf16.msra.mxu0 %v483
        %1065 = vmatprep.subr.bf16.mxu0 %v486
        %1066 = vmatpush1.bf16.msra.mxu0 %v485
        %1067 = vmatprep.subr.bf16.mxu0 0
        %1068 = vmatpush1.bf16.msra.mxu0 0
        %1069 = vmatprep.subr.bf16.mxu0 0
        %1070 = vmatpush1.bf16.msra.mxu0 0
        %1071 = vmatprep.subr.bf16.mxu0 0
        %1072 = vmatpush1.bf16.msra.mxu0 0
        %1073 = vmatprep.subr.bf16.mxu0 0
        %1074 = vmatpush1.bf16.msra.mxu0 0
        %1075 = vmatprep.subr.bf16.mxu0 0
        %1076 = vmatpush1.bf16.msra.mxu0 0
        %1077 = vmatprep.subr.bf16.mxu0 0
        %1078 = vmatpush1.bf16.msra.mxu0 0
        %1079 = vmatprep.subr.bf16.mxu0 0
        %1080 = vmatpush1.bf16.msra.mxu0 0
        %1081 = vmatprep.subr.bf16.mxu0 0
        %1082 = vmatpush1.bf16.msra.mxu0 0
        %1083 = vmatprep.mubr.bf16.mxu0 0
        %1084 = vmatmul.mubr.bf16.gmra.mrb[0].mxu0 %v292
        %v1085 = vpop.f32.mrb[0].mxu0
        %v1086 = vadd.f32 %v1043, %v1085
        %v1087 = vpop.f32.mrb[0].mxu0
        %v1088 = vadd.f32 %v1045, %v1087
        %v1089 = vpop.f32.mrb[0].mxu0
        %v1090 = vadd.f32 %v1047, %v1089
        %v1091 = vpop.f32.mrb[0].mxu0
        %v1092 = vadd.f32 %v1049, %v1091
        %1093 = vdwg.mxu0
        %1094 = vmatprep.subr.bf16.mxu0 %v624
        %1095 = vmatpush1.bf16.msra.mxu0 %v623
        %1096 = vmatprep.subr.bf16.mxu0 %v626
        %1097 = vmatpush1.bf16.msra.mxu0 %v625
        %1098 = vmatprep.subr.bf16.mxu0 %v628
        %1099 = vmatpush1.bf16.msra.mxu0 %v627
        %1100 = vmatprep.subr.bf16.mxu0 %v630
        %1101 = vmatpush1.bf16.msra.mxu0 %v629
        %1102 = vmatprep.subr.bf16.mxu0 %v632
        %1103 = vmatpush1.bf16.msra.mxu0 %v631
        %1104 = vmatprep.subr.bf16.mxu0 %v634
        %1105 = vmatpush1.bf16.msra.mxu0 %v633
        %1106 = vmatprep.subr.bf16.mxu0 %v636
        %1107 = vmatpush1.bf16.msra.mxu0 %v635
        %1108 = vmatprep.subr.bf16.mxu0 %v638
        %1109 = vmatpush1.bf16.msra.mxu0 %v637
        %1110 = vmatprep.subr.bf16.mxu0 0
        %1111 = vmatpush1.bf16.msra.mxu0 0
        %1112 = vmatprep.subr.bf16.mxu0 0
        %1113 = vmatpush1.bf16.msra.mxu0 0
        %1114 = vmatprep.subr.bf16.mxu0 0
        %1115 = vmatpush1.bf16.msra.mxu0 0
        %1116 = vmatprep.subr.bf16.mxu0 0
        %1117 = vmatpush1.bf16.msra.mxu0 0
        %1118 = vmatprep.subr.bf16.mxu0 0
        %1119 = vmatpush1.bf16.msra.mxu0 0
        %1120 = vmatprep.subr.bf16.mxu0 0
        %1121 = vmatpush1.bf16.msra.mxu0 0
        %1122 = vmatprep.subr.bf16.mxu0 0
        %1123 = vmatpush1.bf16.msra.mxu0 0
        %1124 = vmatprep.subr.bf16.mxu0 0
        %1125 = vmatpush1.bf16.msra.mxu0 0
        %1126 = vmatprep.mubr.bf16.mxu0 0
        %1127 = vmatmul.mubr.bf16.gmra.mrb[0].mxu0 %v729
        %v1128 = vpop.f32.mrb[0].mxu0
        %v1129 = vadd.f32 0.0, %v1128
        %v1130 = vpop.f32.mrb[0].mxu0
        %v1131 = vadd.f32 0.0, %v1130
        %v1132 = vpop.f32.mrb[0].mxu0
        %v1133 = vadd.f32 0.0, %v1132
        %v1134 = vpop.f32.mrb[0].mxu0
        %v1135 = vadd.f32 0.0, %v1134
        %1136 = vdwg.mxu0
        %v1137 = vadd.f32 %v1086, %v1129
        %v1138 = vadd.f32 %v1088, %v1131
        %v1139 = vadd.f32 %v1090, %v1133
        %v1140 = vadd.f32 %v1092, %v1135
        %1141 = vmatprep.subr.bf16.mxu0 %v780
        %1142 = vmatpush1.bf16.msra.mxu0 %v779
        %1143 = vmatprep.subr.bf16.mxu0 %v782
        %1144 = vmatpush1.bf16.msra.mxu0 %v781
        %1145 = vmatprep.subr.bf16.mxu0 %v784
        %1146 = vmatpush1.bf16.msra.mxu0 %v783
        %1147 = vmatprep.subr.bf16.mxu0 %v786
        %1148 = vmatpush1.bf16.msra.mxu0 %v785
        %1149 = vmatprep.subr.bf16.mxu0 %v788
        %1150 = vmatpush1.bf16.msra.mxu0 %v787
        %1151 = vmatprep.subr.bf16.mxu0 %v790
        %1152 = vmatpush1.bf16.msra.mxu0 %v789
        %1153 = vmatprep.subr.bf16.mxu0 %v792
        %1154 = vmatpush1.bf16.msra.mxu0 %v791
        %1155 = vmatprep.subr.bf16.mxu0 %v794
        %1156 = vmatpush1.bf16.msra.mxu0 %v793
        %1157 = vmatprep.subr.bf16.mxu0 0
        %1158 = vmatpush1.bf16.msra.mxu0 0
        %1159 = vmatprep.subr.bf16.mxu0 0
        %1160 = vmatpush1.bf16.msra.mxu0 0
        %1161 = vmatprep.subr.bf16.mxu0 0
        %1162 = vmatpush1.bf16.msra.mxu0 0
        %1163 = vmatprep.subr.bf16.mxu0 0
        %1164 = vmatpush1.bf16.msra.mxu0 0
        %1165 = vmatprep.subr.bf16.mxu0 0
        %1166 = vmatpush1.bf16.msra.mxu0 0
        %1167 = vmatprep.subr.bf16.mxu0 0
        %1168 = vmatpush1.bf16.msra.mxu0 0
        %1169 = vmatprep.subr.bf16.mxu0 0
        %1170 = vmatpush1.bf16.msra.mxu0 0
        %1171 = vmatprep.subr.bf16.mxu0 0
        %1172 = vmatpush1.bf16.msra.mxu0 0
        %1173 = vmatprep.mubr.bf16.mxu0 0
        %1174 = vmatmul.mubr.bf16.gmra.mrb[0].mxu0 %v879
        %v1175 = vpop.f32.mrb[0].mxu0
        %v1176 = vadd.f32 0.0, %v1175
        %v1177 = vpop.f32.mrb[0].mxu0
        %v1178 = vadd.f32 0.0, %v1177
        %v1179 = vpop.f32.mrb[0].mxu0
        %v1180 = vadd.f32 0.0, %v1179
        %v1181 = vpop.f32.mrb[0].mxu0
        %v1182 = vadd.f32 0.0, %v1181
        %1183 = vdwg.mxu0
        %v1184 = vadd.f32 %v1137, %v1176
        %v1185 = vadd.f32 %v1138, %v1178
        %v1186 = vadd.f32 %v1139, %v1180
        %v1187 = vadd.f32 %v1140, %v1182
        %v1188 = vld [vmem:[%s268] sm:$0xe]
        %v1190 = vunpack.c.l.b16 %v1188
        %v1191 = vpack.c.b16 %v721, %v1190
        %v1192 = vrot.slane %v1191, 1
        %1194 = vmatprep.subr.bf16.mxu0 %v930
        %1195 = vmatpush1.bf16.msra.mxu0 %v929
        %1196 = vmatprep.subr.bf16.mxu0 %v932
        %1197 = vmatpush1.bf16.msra.mxu0 %v931
        %1198 = vmatprep.subr.bf16.mxu0 %v934
        %1199 = vmatpush1.bf16.msra.mxu0 %v933
        %1200 = vmatprep.subr.bf16.mxu0 %v936
        %1201 = vmatpush1.bf16.msra.mxu0 %v935
        %1202 = vmatprep.subr.bf16.mxu0 %v938
        %1203 = vmatpush1.bf16.msra.mxu0 %v937
        %1204 = vmatprep.subr.bf16.mxu0 %v940
        %1205 = vmatpush1.bf16.msra.mxu0 %v939
        %1206 = vmatprep.subr.bf16.mxu0 %v942
        %1207 = vmatpush1.bf16.msra.mxu0 %v941
        %1208 = vmatprep.subr.bf16.mxu0 %v944
        %1209 = vmatpush1.bf16.msra.mxu0 %v943
        %1210 = vmatprep.subr.bf16.mxu0 0
        %1211 = vmatpush1.bf16.msra.mxu0 0
        %1212 = vmatprep.subr.bf16.mxu0 0
        %1213 = vmatpush1.bf16.msra.mxu0 0
        %1214 = vmatprep.subr.bf16.mxu0 0
        %1215 = vmatpush1.bf16.msra.mxu0 0
        %1216 = vmatprep.subr.bf16.mxu0 0
        %1217 = vmatpush1.bf16.msra.mxu0 0
        %1218 = vmatprep.subr.bf16.mxu0 0
        %1219 = vmatpush1.bf16.msra.mxu0 0
        %1220 = vmatprep.subr.bf16.mxu0 0
        %1221 = vmatpush1.bf16.msra.mxu0 0
        %1222 = vmatprep.subr.bf16.mxu0 0
        %1223 = vmatpush1.bf16.msra.mxu0 0
        %1224 = vmatprep.subr.bf16.mxu0 0
        %1225 = vmatpush1.bf16.msra.mxu0 0
        %1226 = vmatprep.mubr.bf16.mxu0 0
        %1227 = vmatmul.mubr.bf16.gmra.mrb[0].mxu0 %v1192
        %v1228 = vpop.f32.mrb[0].mxu0
        %v1229 = vadd.f32 0.0, %v1228
        %v1230 = vpop.f32.mrb[0].mxu0
        %v1231 = vadd.f32 0.0, %v1230
        %v1232 = vpop.f32.mrb[0].mxu0
        %v1233 = vadd.f32 0.0, %v1232
        %v1234 = vpop.f32.mrb[0].mxu0
        %v1235 = vadd.f32 0.0, %v1234
        %1236 = vdwg.mxu0
        %v1237 = vadd.f32 %v1184, %v1229
        %v1238 = vadd.f32 %v1185, %v1231
        %v1239 = vadd.f32 %v1186, %v1233
        %v1240 = vadd.f32 %v1187, %v1235
        %v1241 = vmax.f32 %v1004, %v1237
        %v1242 = vmax.f32 %v1005, %v1238
        %v1243 = vmax.f32 %v1006, %v1239
        %v1244 = vmax.f32 %v1007, %v1240
        %v1245 = vmax.f32 %v1241, %v1242
        %v1246 = vmax.f32 %v1243, %v1244
        %v1247 = vmax.f32 %v1245, 0.0
        %v1248 = vmax.f32 %v1246, 0.0
        %v1249 = vpack.c.bf16 %v1248, %v1247
        %v1251 = vunpack.c.l.b16 %v1249
        %v1252 = vunpack.c.h.b16 %v1249
        %v1253 = vpack.c.b16 %v1251, %v1251
        %v1254 = vpack.c.b16 %v1252, %v1252
        %1257 = vst [vmem:[#allocation2] sm:$0xf] %v1253
        %1258 = vst [vmem:[#allocation2 + $0x4] sm:$0x7] %v1254
        %v1259 = vld [vmem:[#allocation2] sm:$0xf]
        %v1260 = vld [vmem:[#allocation2 + $0x4] sm:$0x1]
        %v1261 = vld [vmem:[%s2] sm:$0xff]
        %v1262 = vld [vmem:[%s2 + $0x8] sm:$0xff]
        %v1263 = vld [vmem:[%s2 + $0x10] sm:$0xff]
        %v1264 = vld [vmem:[%s2 + $0x18] sm:$0xff]
        %v1265 = vld [vmem:[%s2 + $0x20] sm:$0xff]
        %v1266 = vld [vmem:[%s2 + $0x28] sm:$0xff]
        %v1267 = vld [vmem:[%s2 + $0x30] sm:$0xff]
        %v1268 = vld [vmem:[%s2 + $0x38] sm:$0xff]
        %v1269 = vld [vmem:[%s2 + $0x40] sm:$0xff]
        %v1270 = vld [vmem:[%s2 + $0x48] sm:$0xff]
        %v1271 = vld [vmem:[%s2 + $0x50] sm:$0xff]
        %v1272 = vld [vmem:[%s2 + $0x58] sm:$0xff]
        %v1273 = vld [vmem:[%s2 + $0x60] sm:$0xff]
        %v1274 = vld [vmem:[%s2 + $0x68] sm:$0xff]
        %v1275 = vld [vmem:[%s2 + $0x70] sm:$0xff]
        %v1276 = vld [vmem:[%s2 + $0x78] sm:$0xff]
        %v1277 = vld [vmem:[#allocation2 + $0x4] sm:$0x3]
        %s1278 = scalar_lea.vmem %s2, 128
        %v1279 = vld [vmem:[%s1278] sm:$0xff]
        %v1280 = vld [vmem:[%s1278 + $0x8] sm:$0xff]
        %v1281 = vld [vmem:[%s1278 + $0x10] sm:$0xff]
        %v1282 = vld [vmem:[%s1278 + $0x18] sm:$0xff]
        %v1283 = vld [vmem:[%s1278 + $0x20] sm:$0xff]
        %v1284 = vld [vmem:[%s1278 + $0x28] sm:$0xff]
        %v1285 = vld [vmem:[%s1278 + $0x30] sm:$0xff]
        %v1286 = vld [vmem:[%s1278 + $0x38] sm:$0xff]
        %v1287 = vld [vmem:[%s1278 + $0x40] sm:$0xff]
        %v1288 = vld [vmem:[%s1278 + $0x48] sm:$0xff]
        %v1289 = vld [vmem:[%s1278 + $0x50] sm:$0xff]
        %v1290 = vld [vmem:[%s1278 + $0x58] sm:$0xff]
        %v1291 = vld [vmem:[%s1278 + $0x60] sm:$0xff]
        %v1292 = vld [vmem:[%s1278 + $0x68] sm:$0xff]
        %v1293 = vld [vmem:[%s1278 + $0x70] sm:$0xff]
        %v1294 = vld [vmem:[%s1278 + $0x78] sm:$0xff]
        %v1297 = vunpack.c.l.b16 %v1259
        %v1298 = vunpack.c.l.b16 %v1277
        %v1299 = vpack.c.b16 %v1298, %v1297
        %v1301 = vshrl.u32 %v1299, 16
        %v1303 = vshll.u32 %v1299, 16
        %v1305 = vrot.slane %v1303, 1
        %v1306 = vor.u32 %v1301, %v1305
        %v1324 = vunpack.c.l.b16 %v1279
        %v1325 = vunpack.c.h.b16 %v1279
        %v1326 = vunpack.c.l.b16 %v1280
        %v1327 = vunpack.c.h.b16 %v1280
        %v1328 = vunpack.c.l.b16 %v1281
        %v1329 = vunpack.c.h.b16 %v1281
        %v1330 = vunpack.c.l.b16 %v1282
        %v1331 = vunpack.c.h.b16 %v1282
        %v1332 = vunpack.c.l.b16 %v1283
        %v1333 = vunpack.c.h.b16 %v1283
        %v1334 = vunpack.c.l.b16 %v1284
        %v1335 = vunpack.c.h.b16 %v1284
        %v1336 = vunpack.c.l.b16 %v1285
        %v1337 = vunpack.c.h.b16 %v1285
        %v1338 = vunpack.c.l.b16 %v1286
        %v1339 = vunpack.c.h.b16 %v1286
        %v1340 = vunpack.c.l.b16 %v1287
        %v1341 = vunpack.c.h.b16 %v1287
        %v1342 = vunpack.c.l.b16 %v1288
        %v1343 = vunpack.c.h.b16 %v1288
        %v1344 = vunpack.c.l.b16 %v1289
        %v1345 = vunpack.c.h.b16 %v1289
        %v1346 = vunpack.c.l.b16 %v1290
        %v1347 = vunpack.c.h.b16 %v1290
        %v1348 = vunpack.c.l.b16 %v1291
        %v1349 = vunpack.c.h.b16 %v1291
        %v1350 = vunpack.c.l.b16 %v1292
        %v1351 = vunpack.c.h.b16 %v1292
        %v1352 = vunpack.c.l.b16 %v1293
        %v1353 = vunpack.c.h.b16 %v1293
        %v1354 = vunpack.c.l.b16 %v1294
        %v1355 = vunpack.c.h.b16 %v1294
        %v1356 = vpack.c.b16 %v1326, %v1324
        %v1357 = vpack.c.b16 %v1327, %v1325
        %v1358 = vpack.c.b16 %v1330, %v1328
        %v1359 = vpack.c.b16 %v1331, %v1329
        %v1360 = vpack.c.b16 %v1334, %v1332
        %v1361 = vpack.c.b16 %v1335, %v1333
        %v1362 = vpack.c.b16 %v1338, %v1336
        %v1363 = vpack.c.b16 %v1339, %v1337
        %v1364 = vpack.c.b16 %v1342, %v1340
        %v1365 = vpack.c.b16 %v1343, %v1341
        %v1366 = vpack.c.b16 %v1346, %v1344
        %v1367 = vpack.c.b16 %v1347, %v1345
        %v1368 = vpack.c.b16 %v1350, %v1348
        %v1369 = vpack.c.b16 %v1351, %v1349
        %v1370 = vpack.c.b16 %v1354, %v1352
        %v1371 = vpack.c.b16 %v1355, %v1353
        %1388 = vmatprep.subr.bf16.mxu0 %v1357
        %1389 = vmatpush1.bf16.msra.mxu0 %v1356
        %1390 = vmatprep.subr.bf16.mxu0 %v1359
        %1391 = vmatpush1.bf16.msra.mxu0 %v1358
        %1392 = vmatprep.subr.bf16.mxu0 %v1361
        %1393 = vmatpush1.bf16.msra.mxu0 %v1360
        %1394 = vmatprep.subr.bf16.mxu0 %v1363
        %1395 = vmatpush1.bf16.msra.mxu0 %v1362
        %1396 = vmatprep.subr.bf16.mxu0 %v1365
        %1397 = vmatpush1.bf16.msra.mxu0 %v1364
        %1398 = vmatprep.subr.bf16.mxu0 %v1367
        %1399 = vmatpush1.bf16.msra.mxu0 %v1366
        %1400 = vmatprep.subr.bf16.mxu0 %v1369
        %1401 = vmatpush1.bf16.msra.mxu0 %v1368
        %1402 = vmatprep.subr.bf16.mxu0 %v1371
        %1403 = vmatpush1.bf16.msra.mxu0 %v1370
        %1404 = vmatprep.subr.bf16.mxu0 0
        %1405 = vmatpush1.bf16.msra.mxu0 0
        %1406 = vmatprep.subr.bf16.mxu0 0
        %1407 = vmatpush1.bf16.msra.mxu0 0
        %1408 = vmatprep.subr.bf16.mxu0 0
        %1409 = vmatpush1.bf16.msra.mxu0 0
        %1410 = vmatprep.subr.bf16.mxu0 0
        %1411 = vmatpush1.bf16.msra.mxu0 0
        %1412 = vmatprep.subr.bf16.mxu0 0
        %1413 = vmatpush1.bf16.msra.mxu0 0
        %1414 = vmatprep.subr.bf16.mxu0 0
        %1415 = vmatpush1.bf16.msra.mxu0 0
        %1416 = vmatprep.subr.bf16.mxu0 0
        %1417 = vmatpush1.bf16.msra.mxu0 0
        %1418 = vmatprep.subr.bf16.mxu0 0
        %1419 = vmatpush1.bf16.msra.mxu0 0
        %1420 = vmatprep.mubr.bf16.mxu0 0
        %1421 = vmatmul.mubr.bf16.gmra.mrb[0].mxu0 %v1306
        %v1422 = vpop.f32.mrb[0].mxu0
        %v1423 = vadd.f32 0.0, %v1422
        %v1424 = vpop.f32.mrb[0].mxu0
        %v1425 = vadd.f32 0.0, %v1424
        %v1426 = vpop.f32.mrb[0].mxu0
        %v1427 = vadd.f32 0.0, %v1426
        %v1428 = vpop.f32.mrb[0].mxu0
        %v1429 = vadd.f32 0.0, %v1428
        %1430 = vdwg.mxu0
        %v1432 = vunpack.c.l.b16 %v1260
        %v1433 = vpack.c.b16 %v1432, %v1297
        %v1451 = vunpack.c.l.b16 %v1261
        %v1452 = vunpack.c.h.b16 %v1261
        %v1453 = vunpack.c.l.b16 %v1262
        %v1454 = vunpack.c.h.b16 %v1262
        %v1455 = vunpack.c.l.b16 %v1263
        %v1456 = vunpack.c.h.b16 %v1263
        %v1457 = vunpack.c.l.b16 %v1264
        %v1458 = vunpack.c.h.b16 %v1264
        %v1459 = vunpack.c.l.b16 %v1265
        %v1460 = vunpack.c.h.b16 %v1265
        %v1461 = vunpack.c.l.b16 %v1266
        %v1462 = vunpack.c.h.b16 %v1266
        %v1463 = vunpack.c.l.b16 %v1267
        %v1464 = vunpack.c.h.b16 %v1267
        %v1465 = vunpack.c.l.b16 %v1268
        %v1466 = vunpack.c.h.b16 %v1268
        %v1467 = vunpack.c.l.b16 %v1269
        %v1468 = vunpack.c.h.b16 %v1269
        %v1469 = vunpack.c.l.b16 %v1270
        %v1470 = vunpack.c.h.b16 %v1270
        %v1471 = vunpack.c.l.b16 %v1271
        %v1472 = vunpack.c.h.b16 %v1271
        %v1473 = vunpack.c.l.b16 %v1272
        %v1474 = vunpack.c.h.b16 %v1272
        %v1475 = vunpack.c.l.b16 %v1273
        %v1476 = vunpack.c.h.b16 %v1273
        %v1477 = vunpack.c.l.b16 %v1274
        %v1478 = vunpack.c.h.b16 %v1274
        %v1479 = vunpack.c.l.b16 %v1275
        %v1480 = vunpack.c.h.b16 %v1275
        %v1481 = vunpack.c.l.b16 %v1276
        %v1482 = vunpack.c.h.b16 %v1276
        %v1483 = vpack.c.b16 %v1453, %v1451
        %v1484 = vpack.c.b16 %v1454, %v1452
        %v1485 = vpack.c.b16 %v1457, %v1455
        %v1486 = vpack.c.b16 %v1458, %v1456
        %v1487 = vpack.c.b16 %v1461, %v1459
        %v1488 = vpack.c.b16 %v1462, %v1460
        %v1489 = vpack.c.b16 %v1465, %v1463
        %v1490 = vpack.c.b16 %v1466, %v1464
        %v1491 = vpack.c.b16 %v1469, %v1467
        %v1492 = vpack.c.b16 %v1470, %v1468
        %v1493 = vpack.c.b16 %v1473, %v1471
        %v1494 = vpack.c.b16 %v1474, %v1472
        %v1495 = vpack.c.b16 %v1477, %v1475
        %v1496 = vpack.c.b16 %v1478, %v1476
        %v1497 = vpack.c.b16 %v1481, %v1479
        %v1498 = vpack.c.b16 %v1482, %v1480
        %1515 = vmatprep.subr.bf16.mxu0 %v1484
        %1516 = vmatpush1.bf16.msra.mxu0 %v1483
        %1517 = vmatprep.subr.bf16.mxu0 %v1486
        %1518 = vmatpush1.bf16.msra.mxu0 %v1485
        %1519 = vmatprep.subr.bf16.mxu0 %v1488
        %1520 = vmatpush1.bf16.msra.mxu0 %v1487
        %1521 = vmatprep.subr.bf16.mxu0 %v1490
        %1522 = vmatpush1.bf16.msra.mxu0 %v1489
        %1523 = vmatprep.subr.bf16.mxu0 %v1492
        %1524 = vmatpush1.bf16.msra.mxu0 %v1491
        %1525 = vmatprep.subr.bf16.mxu0 %v1494
        %1526 = vmatpush1.bf16.msra.mxu0 %v1493
        %1527 = vmatprep.subr.bf16.mxu0 %v1496
        %1528 = vmatpush1.bf16.msra.mxu0 %v1495
        %1529 = vmatprep.subr.bf16.mxu0 %v1498
        %1530 = vmatpush1.bf16.msra.mxu0 %v1497
        %1531 = vmatprep.subr.bf16.mxu0 0
        %1532 = vmatpush1.bf16.msra.mxu0 0
        %1533 = vmatprep.subr.bf16.mxu0 0
        %1534 = vmatpush1.bf16.msra.mxu0 0
        %1535 = vmatprep.subr.bf16.mxu0 0
        %1536 = vmatpush1.bf16.msra.mxu0 0
        %1537 = vmatprep.subr.bf16.mxu0 0
        %1538 = vmatpush1.bf16.msra.mxu0 0
        %1539 = vmatprep.subr.bf16.mxu0 0
        %1540 = vmatpush1.bf16.msra.mxu0 0
        %1541 = vmatprep.subr.bf16.mxu0 0
        %1542 = vmatpush1.bf16.msra.mxu0 0
        %1543 = vmatprep.subr.bf16.mxu0 0
        %1544 = vmatpush1.bf16.msra.mxu0 0
        %1545 = vmatprep.subr.bf16.mxu0 0
        %1546 = vmatpush1.bf16.msra.mxu0 0
        %1547 = vmatprep.mubr.bf16.mxu0 0
        %1548 = vmatmul.mubr.bf16.gmra.mrb[0].mxu0 %v1433
        %v1549 = vpop.f32.mrb[0].mxu0
        %v1550 = vadd.f32 %v1423, %v1549
        %v1551 = vpop.f32.mrb[0].mxu0
        %v1552 = vadd.f32 %v1425, %v1551
        %v1553 = vpop.f32.mrb[0].mxu0
        %v1554 = vadd.f32 %v1427, %v1553
        %v1555 = vpop.f32.mrb[0].mxu0
        %v1556 = vadd.f32 %v1429, %v1555
        %1557 = vdwg.mxu0
        %v1558 = vld [vmem:[#allocation2] sm:$0xe]
        %s1559 = scalar_lea.vmem %s2, 256
        %v1560 = vld [vmem:[%s1559] sm:$0xff]
        %v1561 = vld [vmem:[%s1559 + $0x8] sm:$0xff]
        %v1562 = vld [vmem:[%s1559 + $0x10] sm:$0xff]
        %v1563 = vld [vmem:[%s1559 + $0x18] sm:$0xff]
        %v1564 = vld [vmem:[%s1559 + $0x20] sm:$0xff]
        %v1565 = vld [vmem:[%s1559 + $0x28] sm:$0xff]
        %v1566 = vld [vmem:[%s1559 + $0x30] sm:$0xff]
        %v1567 = vld [vmem:[%s1559 + $0x38] sm:$0xff]
        %v1568 = vld [vmem:[%s1559 + $0x40] sm:$0xff]
        %v1569 = vld [vmem:[%s1559 + $0x48] sm:$0xff]
        %v1570 = vld [vmem:[%s1559 + $0x50] sm:$0xff]
        %v1571 = vld [vmem:[%s1559 + $0x58] sm:$0xff]
        %v1572 = vld [vmem:[%s1559 + $0x60] sm:$0xff]
        %v1573 = vld [vmem:[%s1559 + $0x68] sm:$0xff]
        %v1574 = vld [vmem:[%s1559 + $0x70] sm:$0xff]
        %v1575 = vld [vmem:[%s1559 + $0x78] sm:$0xff]
        %v1577 = vunpack.c.l.b16 %v1558
        %v1578 = vpack.c.b16 %v1298, %v1577
        %v1579 = vrot.slane %v1578, 1
        %v1597 = vunpack.c.l.b16 %v1560
        %v1598 = vunpack.c.h.b16 %v1560
        %v1599 = vunpack.c.l.b16 %v1561
        %v1600 = vunpack.c.h.b16 %v1561
        %v1601 = vunpack.c.l.b16 %v1562
        %v1602 = vunpack.c.h.b16 %v1562
        %v1603 = vunpack.c.l.b16 %v1563
        %v1604 = vunpack.c.h.b16 %v1563
        %v1605 = vunpack.c.l.b16 %v1564
        %v1606 = vunpack.c.h.b16 %v1564
        %v1607 = vunpack.c.l.b16 %v1565
        %v1608 = vunpack.c.h.b16 %v1565
        %v1609 = vunpack.c.l.b16 %v1566
        %v1610 = vunpack.c.h.b16 %v1566
        %v1611 = vunpack.c.l.b16 %v1567
        %v1612 = vunpack.c.h.b16 %v1567
        %v1613 = vunpack.c.l.b16 %v1568
        %v1614 = vunpack.c.h.b16 %v1568
        %v1615 = vunpack.c.l.b16 %v1569
        %v1616 = vunpack.c.h.b16 %v1569
        %v1617 = vunpack.c.l.b16 %v1570
        %v1618 = vunpack.c.h.b16 %v1570
        %v1619 = vunpack.c.l.b16 %v1571
        %v1620 = vunpack.c.h.b16 %v1571
        %v1621 = vunpack.c.l.b16 %v1572
        %v1622 = vunpack.c.h.b16 %v1572
        %v1623 = vunpack.c.l.b16 %v1573
        %v1624 = vunpack.c.h.b16 %v1573
        %v1625 = vunpack.c.l.b16 %v1574
        %v1626 = vunpack.c.h.b16 %v1574
        %v1627 = vunpack.c.l.b16 %v1575
        %v1628 = vunpack.c.h.b16 %v1575
        %v1629 = vpack.c.b16 %v1599, %v1597
        %v1630 = vpack.c.b16 %v1600, %v1598
        %v1631 = vpack.c.b16 %v1603, %v1601
        %v1632 = vpack.c.b16 %v1604, %v1602
        %v1633 = vpack.c.b16 %v1607, %v1605
        %v1634 = vpack.c.b16 %v1608, %v1606
        %v1635 = vpack.c.b16 %v1611, %v1609
        %v1636 = vpack.c.b16 %v1612, %v1610
        %v1637 = vpack.c.b16 %v1615, %v1613
        %v1638 = vpack.c.b16 %v1616, %v1614
        %v1639 = vpack.c.b16 %v1619, %v1617
        %v1640 = vpack.c.b16 %v1620, %v1618
        %v1641 = vpack.c.b16 %v1623, %v1621
        %v1642 = vpack.c.b16 %v1624, %v1622
        %v1643 = vpack.c.b16 %v1627, %v1625
        %v1644 = vpack.c.b16 %v1628, %v1626
        %1661 = vmatprep.subr.bf16.mxu0 %v1630
        %1662 = vmatpush1.bf16.msra.mxu0 %v1629
        %1663 = vmatprep.subr.bf16.mxu0 %v1632
        %1664 = vmatpush1.bf16.msra.mxu0 %v1631
        %1665 = vmatprep.subr.bf16.mxu0 %v1634
        %1666 = vmatpush1.bf16.msra.mxu0 %v1633
        %1667 = vmatprep.subr.bf16.mxu0 %v1636
        %1668 = vmatpush1.bf16.msra.mxu0 %v1635
        %1669 = vmatprep.subr.bf16.mxu0 %v1638
        %1670 = vmatpush1.bf16.msra.mxu0 %v1637
        %1671 = vmatprep.subr.bf16.mxu0 %v1640
        %1672 = vmatpush1.bf16.msra.mxu0 %v1639
        %1673 = vmatprep.subr.bf16.mxu0 %v1642
        %1674 = vmatpush1.bf16.msra.mxu0 %v1641
        %1675 = vmatprep.subr.bf16.mxu0 %v1644
        %1676 = vmatpush1.bf16.msra.mxu0 %v1643
        %1677 = vmatprep.subr.bf16.mxu0 0
        %1678 = vmatpush1.bf16.msra.mxu0 0
        %1679 = vmatprep.subr.bf16.mxu0 0
        %1680 = vmatpush1.bf16.msra.mxu0 0
        %1681 = vmatprep.subr.bf16.mxu0 0
        %1682 = vmatpush1.bf16.msra.mxu0 0
        %1683 = vmatprep.subr.bf16.mxu0 0
        %1684 = vmatpush1.bf16.msra.mxu0 0
        %1685 = vmatprep.subr.bf16.mxu0 0
        %1686 = vmatpush1.bf16.msra.mxu0 0
        %1687 = vmatprep.subr.bf16.mxu0 0
        %1688 = vmatpush1.bf16.msra.mxu0 0
        %1689 = vmatprep.subr.bf16.mxu0 0
        %1690 = vmatpush1.bf16.msra.mxu0 0
        %1691 = vmatprep.subr.bf16.mxu0 0
        %1692 = vmatpush1.bf16.msra.mxu0 0
        %1693 = vmatprep.mubr.bf16.mxu0 0
        %1694 = vmatmul.mubr.bf16.gmra.mrb[0].mxu0 %v1579
        %v1695 = vpop.f32.mrb[0].mxu0
        %v1696 = vadd.f32 0.0, %v1695
        %v1697 = vpop.f32.mrb[0].mxu0
        %v1698 = vadd.f32 0.0, %v1697
        %v1699 = vpop.f32.mrb[0].mxu0
        %v1700 = vadd.f32 0.0, %v1699
        %v1701 = vpop.f32.mrb[0].mxu0
        %v1702 = vadd.f32 0.0, %v1701
        %1703 = vdwg.mxu0
        %v1704 = vadd.f32 %v1550, %v1696
        %v1705 = vadd.f32 %v1552, %v1698
        %v1706 = vadd.f32 %v1554, %v1700
        %v1707 = vadd.f32 %v1556, %v1702
        %v1708 = vld [vmem:[#allocation2 + $0x4] sm:$0x7]
        %s1709 = scalar_lea.vmem %s2, 384
        %v1710 = vld [vmem:[%s1709] sm:$0xff]
        %v1711 = vld [vmem:[%s1709 + $0x8] sm:$0xff]
        %v1712 = vld [vmem:[%s1709 + $0x10] sm:$0xff]
        %v1713 = vld [vmem:[%s1709 + $0x18] sm:$0xff]
        %v1714 = vld [vmem:[%s1709 + $0x20] sm:$0xff]
        %v1715 = vld [vmem:[%s1709 + $0x28] sm:$0xff]
        %v1716 = vld [vmem:[%s1709 + $0x30] sm:$0xff]
        %v1717 = vld [vmem:[%s1709 + $0x38] sm:$0xff]
        %v1718 = vld [vmem:[%s1709 + $0x40] sm:$0xff]
        %v1719 = vld [vmem:[%s1709 + $0x48] sm:$0xff]
        %v1720 = vld [vmem:[%s1709 + $0x50] sm:$0xff]
        %v1721 = vld [vmem:[%s1709 + $0x58] sm:$0xff]
        %v1722 = vld [vmem:[%s1709 + $0x60] sm:$0xff]
        %v1723 = vld [vmem:[%s1709 + $0x68] sm:$0xff]
        %v1724 = vld [vmem:[%s1709 + $0x70] sm:$0xff]
        %v1725 = vld [vmem:[%s1709 + $0x78] sm:$0xff]
        %v1727 = vunpack.c.l.b16 %v1708
        %v1728 = vpack.c.b16 %v1727, %v1577
        %v1730 = vshrl.u32 %v1728, 16
        %v1732 = vrot.slane %v1730, 1
        %v1733 = vshll.u32 %v1728, 16
        %v1735 = vrot.slane %v1733, 2
        %v1736 = vor.u32 %v1732, %v1735
        %v1754 = vunpack.c.l.b16 %v1710
        %v1755 = vunpack.c.h.b16 %v1710
        %v1756 = vunpack.c.l.b16 %v1711
        %v1757 = vunpack.c.h.b16 %v1711
        %v1758 = vunpack.c.l.b16 %v1712
        %v1759 = vunpack.c.h.b16 %v1712
        %v1760 = vunpack.c.l.b16 %v1713
        %v1761 = vunpack.c.h.b16 %v1713
        %v1762 = vunpack.c.l.b16 %v1714
        %v1763 = vunpack.c.h.b16 %v1714
        %v1764 = vunpack.c.l.b16 %v1715
        %v1765 = vunpack.c.h.b16 %v1715
        %v1766 = vunpack.c.l.b16 %v1716
        %v1767 = vunpack.c.h.b16 %v1716
        %v1768 = vunpack.c.l.b16 %v1717
        %v1769 = vunpack.c.h.b16 %v1717
        %v1770 = vunpack.c.l.b16 %v1718
        %v1771 = vunpack.c.h.b16 %v1718
        %v1772 = vunpack.c.l.b16 %v1719
        %v1773 = vunpack.c.h.b16 %v1719
        %v1774 = vunpack.c.l.b16 %v1720
        %v1775 = vunpack.c.h.b16 %v1720
        %v1776 = vunpack.c.l.b16 %v1721
        %v1777 = vunpack.c.h.b16 %v1721
        %v1778 = vunpack.c.l.b16 %v1722
        %v1779 = vunpack.c.h.b16 %v1722
        %v1780 = vunpack.c.l.b16 %v1723
        %v1781 = vunpack.c.h.b16 %v1723
        %v1782 = vunpack.c.l.b16 %v1724
        %v1783 = vunpack.c.h.b16 %v1724
        %v1784 = vunpack.c.l.b16 %v1725
        %v1785 = vunpack.c.h.b16 %v1725
        %v1786 = vpack.c.b16 %v1756, %v1754
        %v1787 = vpack.c.b16 %v1757, %v1755
        %v1788 = vpack.c.b16 %v1760, %v1758
        %v1789 = vpack.c.b16 %v1761, %v1759
        %v1790 = vpack.c.b16 %v1764, %v1762
        %v1791 = vpack.c.b16 %v1765, %v1763
        %v1792 = vpack.c.b16 %v1768, %v1766
        %v1793 = vpack.c.b16 %v1769, %v1767
        %v1794 = vpack.c.b16 %v1772, %v1770
        %v1795 = vpack.c.b16 %v1773, %v1771
        %v1796 = vpack.c.b16 %v1776, %v1774
        %v1797 = vpack.c.b16 %v1777, %v1775
        %v1798 = vpack.c.b16 %v1780, %v1778
        %v1799 = vpack.c.b16 %v1781, %v1779
        %v1800 = vpack.c.b16 %v1784, %v1782
        %v1801 = vpack.c.b16 %v1785, %v1783
        %1818 = vmatprep.subr.bf16.mxu0 %v1787
        %1819 = vmatpush1.bf16.msra.mxu0 %v1786
        %1820 = vmatprep.subr.bf16.mxu0 %v1789
        %1821 = vmatpush1.bf16.msra.mxu0 %v1788
        %1822 = vmatprep.subr.bf16.mxu0 %v1791
        %1823 = vmatpush1.bf16.msra.mxu0 %v1790
        %1824 = vmatprep.subr.bf16.mxu0 %v1793
        %1825 = vmatpush1.bf16.msra.mxu0 %v1792
        %1826 = vmatprep.subr.bf16.mxu0 %v1795
        %1827 = vmatpush1.bf16.msra.mxu0 %v1794
        %1828 = vmatprep.subr.bf16.mxu0 %v1797
        %1829 = vmatpush1.bf16.msra.mxu0 %v1796
        %1830 = vmatprep.subr.bf16.mxu0 %v1799
        %1831 = vmatpush1.bf16.msra.mxu0 %v1798
        %1832 = vmatprep.subr.bf16.mxu0 %v1801
        %1833 = vmatpush1.bf16.msra.mxu0 %v1800
        %1834 = vmatprep.subr.bf16.mxu0 0
        %1835 = vmatpush1.bf16.msra.mxu0 0
        %1836 = vmatprep.subr.bf16.mxu0 0
        %1837 = vmatpush1.bf16.msra.mxu0 0
        %1838 = vmatprep.subr.bf16.mxu0 0
        %1839 = vmatpush1.bf16.msra.mxu0 0
        %1840 = vmatprep.subr.bf16.mxu0 0
        %1841 = vmatpush1.bf16.msra.mxu0 0
        %1842 = vmatprep.subr.bf16.mxu0 0
        %1843 = vmatpush1.bf16.msra.mxu0 0
        %1844 = vmatprep.subr.bf16.mxu0 0
        %1845 = vmatpush1.bf16.msra.mxu0 0
        %1846 = vmatprep.subr.bf16.mxu0 0
        %1847 = vmatpush1.bf16.msra.mxu0 0
        %1848 = vmatprep.subr.bf16.mxu0 0
        %1849 = vmatpush1.bf16.msra.mxu0 0
        %1850 = vmatprep.mubr.bf16.mxu0 0
        %1851 = vmatmul.mubr.bf16.gmra.mrb[0].mxu0 %v1736
        %v1852 = vpop.f32.mrb[0].mxu0
        %v1853 = vadd.f32 0.0, %v1852
        %v1854 = vpop.f32.mrb[0].mxu0
        %v1855 = vadd.f32 0.0, %v1854
        %v1856 = vpop.f32.mrb[0].mxu0
        %v1857 = vadd.f32 0.0, %v1856
        %v1858 = vpop.f32.mrb[0].mxu0
        %v1859 = vadd.f32 0.0, %v1858
        %1860 = vdwg.mxu0
        %v1861 = vadd.f32 %v1704, %v1853
        %v1862 = vadd.f32 %v1705, %v1855
        %v1863 = vadd.f32 %v1706, %v1857
        %v1864 = vadd.f32 %v1707, %v1859
        %v1865 = vld [vmem:[#allocation2] sm:$0xc]
        %s1866 = scalar_lea.vmem %s2, 512
        %v1867 = vld [vmem:[%s1866] sm:$0xff]
        %v1868 = vld [vmem:[%s1866 + $0x8] sm:$0xff]
        %v1869 = vld [vmem:[%s1866 + $0x10] sm:$0xff]
        %v1870 = vld [vmem:[%s1866 + $0x18] sm:$0xff]
        %v1871 = vld [vmem:[%s1866 + $0x20] sm:$0xff]
        %v1872 = vld [vmem:[%s1866 + $0x28] sm:$0xff]
        %v1873 = vld [vmem:[%s1866 + $0x30] sm:$0xff]
        %v1874 = vld [vmem:[%s1866 + $0x38] sm:$0xff]
        %v1875 = vld [vmem:[%s1866 + $0x40] sm:$0xff]
        %v1876 = vld [vmem:[%s1866 + $0x48] sm:$0xff]
        %v1877 = vld [vmem:[%s1866 + $0x50] sm:$0xff]
        %v1878 = vld [vmem:[%s1866 + $0x58] sm:$0xff]
        %v1879 = vld [vmem:[%s1866 + $0x60] sm:$0xff]
        %v1880 = vld [vmem:[%s1866 + $0x68] sm:$0xff]
        %v1881 = vld [vmem:[%s1866 + $0x70] sm:$0xff]
        %v1882 = vld [vmem:[%s1866 + $0x78] sm:$0xff]
        %v1884 = vunpack.c.l.b16 %v1865
        %v1885 = vpack.c.b16 %v1727, %v1884
        %v1886 = vrot.slane %v1885, 2
        %v1904 = vunpack.c.l.b16 %v1867
        %v1905 = vunpack.c.h.b16 %v1867
        %v1906 = vunpack.c.l.b16 %v1868
        %v1907 = vunpack.c.h.b16 %v1868
        %v1908 = vunpack.c.l.b16 %v1869
        %v1909 = vunpack.c.h.b16 %v1869
        %v1910 = vunpack.c.l.b16 %v1870
        %v1911 = vunpack.c.h.b16 %v1870
        %v1912 = vunpack.c.l.b16 %v1871
        %v1913 = vunpack.c.h.b16 %v1871
        %v1914 = vunpack.c.l.b16 %v1872
        %v1915 = vunpack.c.h.b16 %v1872
        %v1916 = vunpack.c.l.b16 %v1873
        %v1917 = vunpack.c.h.b16 %v1873
        %v1918 = vunpack.c.l.b16 %v1874
        %v1919 = vunpack.c.h.b16 %v1874
        %v1920 = vunpack.c.l.b16 %v1875
        %v1921 = vunpack.c.h.b16 %v1875
        %v1922 = vunpack.c.l.b16 %v1876
        %v1923 = vunpack.c.h.b16 %v1876
        %v1924 = vunpack.c.l.b16 %v1877
        %v1925 = vunpack.c.h.b16 %v1877
        %v1926 = vunpack.c.l.b16 %v1878
        %v1927 = vunpack.c.h.b16 %v1878
        %v1928 = vunpack.c.l.b16 %v1879
        %v1929 = vunpack.c.h.b16 %v1879
        %v1930 = vunpack.c.l.b16 %v1880
        %v1931 = vunpack.c.h.b16 %v1880
        %v1932 = vunpack.c.l.b16 %v1881
        %v1933 = vunpack.c.h.b16 %v1881
        %v1934 = vunpack.c.l.b16 %v1882
        %v1935 = vunpack.c.h.b16 %v1882
        %v1936 = vpack.c.b16 %v1906, %v1904
        %v1937 = vpack.c.b16 %v1907, %v1905
        %v1938 = vpack.c.b16 %v1910, %v1908
        %v1939 = vpack.c.b16 %v1911, %v1909
        %v1940 = vpack.c.b16 %v1914, %v1912
        %v1941 = vpack.c.b16 %v1915, %v1913
        %v1942 = vpack.c.b16 %v1918, %v1916
        %v1943 = vpack.c.b16 %v1919, %v1917
        %v1944 = vpack.c.b16 %v1922, %v1920
        %v1945 = vpack.c.b16 %v1923, %v1921
        %v1946 = vpack.c.b16 %v1926, %v1924
        %v1947 = vpack.c.b16 %v1927, %v1925
        %v1948 = vpack.c.b16 %v1930, %v1928
        %v1949 = vpack.c.b16 %v1931, %v1929
        %v1950 = vpack.c.b16 %v1934, %v1932
        %v1951 = vpack.c.b16 %v1935, %v1933
        %1968 = vmatprep.subr.bf16.mxu0 %v1937
        %1969 = vmatpush1.bf16.msra.mxu0 %v1936
        %1970 = vmatprep.subr.bf16.mxu0 %v1939
        %1971 = vmatpush1.bf16.msra.mxu0 %v1938
        %1972 = vmatprep.subr.bf16.mxu0 %v1941
        %1973 = vmatpush1.bf16.msra.mxu0 %v1940
        %1974 = vmatprep.subr.bf16.mxu0 %v1943
        %1975 = vmatpush1.bf16.msra.mxu0 %v1942
        %1976 = vmatprep.subr.bf16.mxu0 %v1945
        %1977 = vmatpush1.bf16.msra.mxu0 %v1944
        %1978 = vmatprep.subr.bf16.mxu0 %v1947
        %1979 = vmatpush1.bf16.msra.mxu0 %v1946
        %1980 = vmatprep.subr.bf16.mxu0 %v1949
        %1981 = vmatpush1.bf16.msra.mxu0 %v1948
        %1982 = vmatprep.subr.bf16.mxu0 %v1951
        %1983 = vmatpush1.bf16.msra.mxu0 %v1950
        %1984 = vmatprep.subr.bf16.mxu0 0
        %1985 = vmatpush1.bf16.msra.mxu0 0
        %1986 = vmatprep.subr.bf16.mxu0 0
        %1987 = vmatpush1.bf16.msra.mxu0 0
        %1988 = vmatprep.subr.bf16.mxu0 0
        %1989 = vmatpush1.bf16.msra.mxu0 0
        %1990 = vmatprep.subr.bf16.mxu0 0
        %1991 = vmatpush1.bf16.msra.mxu0 0
        %1992 = vmatprep.subr.bf16.mxu0 0
        %1993 = vmatpush1.bf16.msra.mxu0 0
        %1994 = vmatprep.subr.bf16.mxu0 0
        %1995 = vmatpush1.bf16.msra.mxu0 0
        %1996 = vmatprep.subr.bf16.mxu0 0
        %1997 = vmatpush1.bf16.msra.mxu0 0
        %1998 = vmatprep.subr.bf16.mxu0 0
        %1999 = vmatpush1.bf16.msra.mxu0 0
        %2000 = vmatprep.mubr.bf16.mxu0 0
        %2001 = vmatmul.mubr.bf16.gmra.mrb[0].mxu0 %v1886
        %v2002 = vpop.f32.mrb[0].mxu0
        %v2003 = vadd.f32 0.0, %v2002
        %v2004 = vpop.f32.mrb[0].mxu0
        %v2005 = vadd.f32 0.0, %v2004
        %v2006 = vpop.f32.mrb[0].mxu0
        %v2007 = vadd.f32 0.0, %v2006
        %v2008 = vpop.f32.mrb[0].mxu0
        %v2009 = vadd.f32 0.0, %v2008
        %2010 = vdwg.mxu0
        %v2011 = vadd.f32 %v1861, %v2003
        %v2012 = vadd.f32 %v1862, %v2005
        %v2013 = vadd.f32 %v1863, %v2007
        %v2014 = vadd.f32 %v1864, %v2009
        %v2015 = vmax.f32 %v2011, %v2012
        %v2016 = vmax.f32 %v2013, %v2014
        %v2018 = vrot.slane %v2015, 1
        %v2020 = vmax.f32 %v2015, %v2018
        %v2022 = vrot.slane %v2016, 1
        %v2024 = vmax.f32 %v2016, %v2022
        %v2026 = vrot.slane %v2020, 1
        %v2028 = vrot.slane %v2020, 2
        %v2030 = vrot.slane %v2020, 3
        %v2033 = vrot.slane %v2024, 4
        %vm2035 = vcmask 1040384
        %v2036 = vsel %vm2035, %v2020, %v2026
        %vm2037 = vcmask 1041408
        %v2038 = vsel %vm2037, %v2036, %v2028
        %vm2039 = vcmask 1042432
        %v2040 = vsel %vm2039, %v2038, %v2030
        %vm2041 = vcmask 1043456
        %v2042 = vsel %vm2041, %v2040, %v2033
        %v2043 = vmax.f32 %v2042, 0.0
        %v2044 = vpack.c.bf16 %v2043, %v2043
        %v2045 = vld [vmem:[%s3] sm:$0xf]
        %v2046 = vld [vmem:[%s3 + $0x4] sm:$0xf]
        %v2047 = vld [vmem:[%s3 + $0x8] sm:$0xf]
        %v2048 = vld [vmem:[%s3 + $0xc] sm:$0xf]
        %v2049 = vld [vmem:[%s3 + $0x10] sm:$0xf]
        %v2050 = vld [vmem:[%s3 + $0x14] sm:$0xf]
        %v2051 = vld [vmem:[%s3 + $0x18] sm:$0xf]
        %v2052 = vld [vmem:[%s3 + $0x1c] sm:$0xf]
        %v2053 = vld [vmem:[%s3 + $0x20] sm:$0xf]
        %v2054 = vld [vmem:[%s3 + $0x24] sm:$0xf]
        %v2055 = vld [vmem:[%s3 + $0x28] sm:$0xf]
        %v2056 = vld [vmem:[%s3 + $0x2c] sm:$0xf]
        %v2057 = vld [vmem:[%s3 + $0x30] sm:$0xf]
        %v2058 = vld [vmem:[%s3 + $0x34] sm:$0xf]
        %v2059 = vld [vmem:[%s3 + $0x38] sm:$0xf]
        %v2060 = vld [vmem:[%s3 + $0x3c] sm:$0xf]
        %s2061 = scalar_lea.vmem %s3, 64
        %v2062 = vld [vmem:[%s2061] sm:$0xf]
        %v2063 = vld [vmem:[%s2061 + $0x4] sm:$0xf]
        %v2064 = vld [vmem:[%s2061 + $0x8] sm:$0xf]
        %v2065 = vld [vmem:[%s2061 + $0xc] sm:$0xf]
        %v2066 = vld [vmem:[%s2061 + $0x10] sm:$0xf]
        %v2067 = vld [vmem:[%s2061 + $0x14] sm:$0xf]
        %v2068 = vld [vmem:[%s2061 + $0x18] sm:$0xf]
        %v2069 = vld [vmem:[%s2061 + $0x1c] sm:$0xf]
        %v2070 = vld [vmem:[%s2061 + $0x20] sm:$0xf]
        %v2071 = vld [vmem:[%s2061 + $0x24] sm:$0xf]
        %v2072 = vld [vmem:[%s2061 + $0x28] sm:$0xf]
        %v2073 = vld [vmem:[%s2061 + $0x2c] sm:$0xf]
        %v2074 = vld [vmem:[%s2061 + $0x30] sm:$0xf]
        %v2075 = vld [vmem:[%s2061 + $0x34] sm:$0xf]
        %v2076 = vld [vmem:[%s2061 + $0x38] sm:$0xf]
        %v2077 = vld [vmem:[%s2061 + $0x3c] sm:$0xf]
        %v2079 = vshrl.u32 %v2044, 16
        %v2098 = vunpack.c.l.b16 %v2062
        %v2099 = vunpack.c.l.b16 %v2063
        %v2100 = vunpack.c.l.b16 %v2064
        %v2101 = vunpack.c.l.b16 %v2065
        %v2102 = vunpack.c.l.b16 %v2066
        %v2103 = vunpack.c.l.b16 %v2067
        %v2104 = vunpack.c.l.b16 %v2068
        %v2105 = vunpack.c.l.b16 %v2069
        %v2106 = vunpack.c.l.b16 %v2070
        %v2107 = vunpack.c.l.b16 %v2071
        %v2108 = vunpack.c.l.b16 %v2072
        %v2109 = vunpack.c.l.b16 %v2073
        %v2110 = vunpack.c.l.b16 %v2074
        %v2111 = vunpack.c.l.b16 %v2075
        %v2112 = vunpack.c.l.b16 %v2076
        %v2113 = vunpack.c.l.b16 %v2077
        %v2114 = vpack.c.b16 %v2099, %v2098
        %v2115 = vpack.c.b16 %v2101, %v2100
        %v2116 = vpack.c.b16 %v2103, %v2102
        %v2117 = vpack.c.b16 %v2105, %v2104
        %v2118 = vpack.c.b16 %v2107, %v2106
        %v2119 = vpack.c.b16 %v2109, %v2108
        %v2120 = vpack.c.b16 %v2111, %v2110
        %v2121 = vpack.c.b16 %v2113, %v2112
        %2130 = vmatprep.subr.bf16.mxu0 0
        %2131 = vmatpush1.bf16.msra.mxu0 %v2114
        %2132 = vmatprep.subr.bf16.mxu0 0
        %2133 = vmatpush1.bf16.msra.mxu0 %v2115
        %2134 = vmatprep.subr.bf16.mxu0 0
        %2135 = vmatpush1.bf16.msra.mxu0 %v2116
        %2136 = vmatprep.subr.bf16.mxu0 0
        %2137 = vmatpush1.bf16.msra.mxu0 %v2117
        %2138 = vmatprep.subr.bf16.mxu0 0
        %2139 = vmatpush1.bf16.msra.mxu0 %v2118
        %2140 = vmatprep.subr.bf16.mxu0 0
        %2141 = vmatpush1.bf16.msra.mxu0 %v2119
        %2142 = vmatprep.subr.bf16.mxu0 0
        %2143 = vmatpush1.bf16.msra.mxu0 %v2120
        %2144 = vmatprep.subr.bf16.mxu0 0
        %2145 = vmatpush1.bf16.msra.mxu0 %v2121
        %2146 = vmatprep.subr.bf16.mxu0 0
        %2147 = vmatpush1.bf16.msra.mxu0 0
        %2148 = vmatprep.subr.bf16.mxu0 0
        %2149 = vmatpush1.bf16.msra.mxu0 0
        %2150 = vmatprep.subr.bf16.mxu0 0
        %2151 = vmatpush1.bf16.msra.mxu0 0
        %2152 = vmatprep.subr.bf16.mxu0 0
        %2153 = vmatpush1.bf16.msra.mxu0 0
        %2154 = vmatprep.subr.bf16.mxu0 0
        %2155 = vmatpush1.bf16.msra.mxu0 0
        %2156 = vmatprep.subr.bf16.mxu0 0
        %2157 = vmatpush1.bf16.msra.mxu0 0
        %2158 = vmatprep.subr.bf16.mxu0 0
        %2159 = vmatpush1.bf16.msra.mxu0 0
        %2160 = vmatprep.subr.bf16.mxu0 0
        %2161 = vmatpush1.bf16.msra.mxu0 0
        %2162 = vmatprep.mubr.bf16.mxu0 0
        %2163 = vmatmul.mubr.bf16.gmra.mrb[0].mxu0 %v2079
        %v2164 = vpop.f32.mrb[0].mxu0
        %v2165 = vadd.f32 0.0, %v2164
        %v2166 = vpop.f32.mrb[0].mxu0
        %v2167 = vpop.f32.mrb[0].mxu0
        %v2168 = vpop.f32.mrb[0].mxu0
        %2169 = vdwg.mxu0
        %v2186 = vunpack.c.l.b16 %v2045
        %v2187 = vunpack.c.l.b16 %v2046
        %v2188 = vunpack.c.l.b16 %v2047
        %v2189 = vunpack.c.l.b16 %v2048
        %v2190 = vunpack.c.l.b16 %v2049
        %v2191 = vunpack.c.l.b16 %v2050
        %v2192 = vunpack.c.l.b16 %v2051
        %v2193 = vunpack.c.l.b16 %v2052
        %v2194 = vunpack.c.l.b16 %v2053
        %v2195 = vunpack.c.l.b16 %v2054
        %v2196 = vunpack.c.l.b16 %v2055
        %v2197 = vunpack.c.l.b16 %v2056
        %v2198 = vunpack.c.l.b16 %v2057
        %v2199 = vunpack.c.l.b16 %v2058
        %v2200 = vunpack.c.l.b16 %v2059
        %v2201 = vunpack.c.l.b16 %v2060
        %v2202 = vpack.c.b16 %v2187, %v2186
        %v2203 = vpack.c.b16 %v2189, %v2188
        %v2204 = vpack.c.b16 %v2191, %v2190
        %v2205 = vpack.c.b16 %v2193, %v2192
        %v2206 = vpack.c.b16 %v2195, %v2194
        %v2207 = vpack.c.b16 %v2197, %v2196
        %v2208 = vpack.c.b16 %v2199, %v2198
        %v2209 = vpack.c.b16 %v2201, %v2200
        %2218 = vmatprep.subr.bf16.mxu0 0
        %2219 = vmatpush1.bf16.msra.mxu0 %v2202
        %2220 = vmatprep.subr.bf16.mxu0 0
        %2221 = vmatpush1.bf16.msra.mxu0 %v2203
        %2222 = vmatprep.subr.bf16.mxu0 0
        %2223 = vmatpush1.bf16.msra.mxu0 %v2204
        %2224 = vmatprep.subr.bf16.mxu0 0
        %2225 = vmatpush1.bf16.msra.mxu0 %v2205
        %2226 = vmatprep.subr.bf16.mxu0 0
        %2227 = vmatpush1.bf16.msra.mxu0 %v2206
        %2228 = vmatprep.subr.bf16.mxu0 0
        %2229 = vmatpush1.bf16.msra.mxu0 %v2207
        %2230 = vmatprep.subr.bf16.mxu0 0
        %2231 = vmatpush1.bf16.msra.mxu0 %v2208
        %2232 = vmatprep.subr.bf16.mxu0 0
        %2233 = vmatpush1.bf16.msra.mxu0 %v2209
        %2234 = vmatprep.subr.bf16.mxu0 0
        %2235 = vmatpush1.bf16.msra.mxu0 0
        %2236 = vmatprep.subr.bf16.mxu0 0
        %2237 = vmatpush1.bf16.msra.mxu0 0
        %2238 = vmatprep.subr.bf16.mxu0 0
        %2239 = vmatpush1.bf16.msra.mxu0 0
        %2240 = vmatprep.subr.bf16.mxu0 0
        %2241 = vmatpush1.bf16.msra.mxu0 0
        %2242 = vmatprep.subr.bf16.mxu0 0
        %2243 = vmatpush1.bf16.msra.mxu0 0
        %2244 = vmatprep.subr.bf16.mxu0 0
        %2245 = vmatpush1.bf16.msra.mxu0 0
        %2246 = vmatprep.subr.bf16.mxu0 0
        %2247 = vmatpush1.bf16.msra.mxu0 0
        %2248 = vmatprep.subr.bf16.mxu0 0
        %2249 = vmatpush1.bf16.msra.mxu0 0
        %2250 = vmatprep.mubr.bf16.mxu0 0
        %2251 = vmatmul.mubr.bf16.gmra.mrb[0].mxu0 %v2044
        %v2252 = vpop.f32.mrb[0].mxu0
        %v2253 = vadd.f32 %v2165, %v2252
        %v2254 = vpop.f32.mrb[0].mxu0
        %v2255 = vpop.f32.mrb[0].mxu0
        %v2256 = vpop.f32.mrb[0].mxu0
        %2257 = vdwg.mxu0
        %s2258 = scalar_lea.vmem %s3, 128
        %v2259 = vld [vmem:[%s2258] sm:$0xf]
        %v2260 = vld [vmem:[%s2258 + $0x4] sm:$0xf]
        %v2261 = vld [vmem:[%s2258 + $0x8] sm:$0xf]
        %v2262 = vld [vmem:[%s2258 + $0xc] sm:$0xf]
        %v2263 = vld [vmem:[%s2258 + $0x10] sm:$0xf]
        %v2264 = vld [vmem:[%s2258 + $0x14] sm:$0xf]
        %v2265 = vld [vmem:[%s2258 + $0x18] sm:$0xf]
        %v2266 = vld [vmem:[%s2258 + $0x1c] sm:$0xf]
        %v2267 = vld [vmem:[%s2258 + $0x20] sm:$0xf]
        %v2268 = vld [vmem:[%s2258 + $0x24] sm:$0xf]
        %v2269 = vld [vmem:[%s2258 + $0x28] sm:$0xf]
        %v2270 = vld [vmem:[%s2258 + $0x2c] sm:$0xf]
        %v2271 = vld [vmem:[%s2258 + $0x30] sm:$0xf]
        %v2272 = vld [vmem:[%s2258 + $0x34] sm:$0xf]
        %v2273 = vld [vmem:[%s2258 + $0x38] sm:$0xf]
        %v2274 = vld [vmem:[%s2258 + $0x3c] sm:$0xf]
        %v2276 = vrot.slane %v2044, 1
        %v2294 = vunpack.c.l.b16 %v2259
        %v2295 = vunpack.c.l.b16 %v2260
        %v2296 = vunpack.c.l.b16 %v2261
        %v2297 = vunpack.c.l.b16 %v2262
        %v2298 = vunpack.c.l.b16 %v2263
        %v2299 = vunpack.c.l.b16 %v2264
        %v2300 = vunpack.c.l.b16 %v2265
        %v2301 = vunpack.c.l.b16 %v2266
        %v2302 = vunpack.c.l.b16 %v2267
        %v2303 = vunpack.c.l.b16 %v2268
        %v2304 = vunpack.c.l.b16 %v2269
        %v2305 = vunpack.c.l.b16 %v2270
        %v2306 = vunpack.c.l.b16 %v2271
        %v2307 = vunpack.c.l.b16 %v2272
        %v2308 = vunpack.c.l.b16 %v2273
        %v2309 = vunpack.c.l.b16 %v2274
        %v2310 = vpack.c.b16 %v2295, %v2294
        %v2311 = vpack.c.b16 %v2297, %v2296
        %v2312 = vpack.c.b16 %v2299, %v2298
        %v2313 = vpack.c.b16 %v2301, %v2300
        %v2314 = vpack.c.b16 %v2303, %v2302
        %v2315 = vpack.c.b16 %v2305, %v2304
        %v2316 = vpack.c.b16 %v2307, %v2306
        %v2317 = vpack.c.b16 %v2309, %v2308
        %2326 = vmatprep.subr.bf16.mxu0 0
        %2327 = vmatpush1.bf16.msra.mxu0 %v2310
        %2328 = vmatprep.subr.bf16.mxu0 0
        %2329 = vmatpush1.bf16.msra.mxu0 %v2311
        %2330 = vmatprep.subr.bf16.mxu0 0
        %2331 = vmatpush1.bf16.msra.mxu0 %v2312
        %2332 = vmatprep.subr.bf16.mxu0 0
        %2333 = vmatpush1.bf16.msra.mxu0 %v2313
        %2334 = vmatprep.subr.bf16.mxu0 0
        %2335 = vmatpush1.bf16.msra.mxu0 %v2314
        %2336 = vmatprep.subr.bf16.mxu0 0
        %2337 = vmatpush1.bf16.msra.mxu0 %v2315
        %2338 = vmatprep.subr.bf16.mxu0 0
        %2339 = vmatpush1.bf16.msra.mxu0 %v2316
        %2340 = vmatprep.subr.bf16.mxu0 0
        %2341 = vmatpush1.bf16.msra.mxu0 %v2317
        %2342 = vmatprep.subr.bf16.mxu0 0
        %2343 = vmatpush1.bf16.msra.mxu0 0
        %2344 = vmatprep.subr.bf16.mxu0 0
        %2345 = vmatpush1.bf16.msra.mxu0 0
        %2346 = vmatprep.subr.bf16.mxu0 0
        %2347 = vmatpush1.bf16.msra.mxu0 0
        %2348 = vmatprep.subr.bf16.mxu0 0
        %2349 = vmatpush1.bf16.msra.mxu0 0
        %2350 = vmatprep.subr.bf16.mxu0 0
        %2351 = vmatpush1.bf16.msra.mxu0 0
        %2352 = vmatprep.subr.bf16.mxu0 0
        %2353 = vmatpush1.bf16.msra.mxu0 0
        %2354 = vmatprep.subr.bf16.mxu0 0
        %2355 = vmatpush1.bf16.msra.mxu0 0
        %2356 = vmatprep.subr.bf16.mxu0 0
        %2357 = vmatpush1.bf16.msra.mxu0 0
        %2358 = vmatprep.mubr.bf16.mxu0 0
        %2359 = vmatmul.mubr.bf16.gmra.mrb[0].mxu0 %v2276
        %v2360 = vpop.f32.mrb[0].mxu0
        %v2361 = vadd.f32 0.0, %v2360
        %v2362 = vpop.f32.mrb[0].mxu0
        %v2363 = vpop.f32.mrb[0].mxu0
        %v2364 = vpop.f32.mrb[0].mxu0
        %2365 = vdwg.mxu0
        %v2366 = vadd.f32 %v2253, %v2361
        %s2367 = scalar_lea.vmem %s3, 192
        %v2368 = vld [vmem:[%s2367] sm:$0xf]
        %v2369 = vld [vmem:[%s2367 + $0x4] sm:$0xf]
        %v2370 = vld [vmem:[%s2367 + $0x8] sm:$0xf]
        %v2371 = vld [vmem:[%s2367 + $0xc] sm:$0xf]
        %v2372 = vld [vmem:[%s2367 + $0x10] sm:$0xf]
        %v2373 = vld [vmem:[%s2367 + $0x14] sm:$0xf]
        %v2374 = vld [vmem:[%s2367 + $0x18] sm:$0xf]
        %v2375 = vld [vmem:[%s2367 + $0x1c] sm:$0xf]
        %v2376 = vld [vmem:[%s2367 + $0x20] sm:$0xf]
        %v2377 = vld [vmem:[%s2367 + $0x24] sm:$0xf]
        %v2378 = vld [vmem:[%s2367 + $0x28] sm:$0xf]
        %v2379 = vld [vmem:[%s2367 + $0x2c] sm:$0xf]
        %v2380 = vld [vmem:[%s2367 + $0x30] sm:$0xf]
        %v2381 = vld [vmem:[%s2367 + $0x34] sm:$0xf]
        %v2382 = vld [vmem:[%s2367 + $0x38] sm:$0xf]
        %v2383 = vld [vmem:[%s2367 + $0x3c] sm:$0xf]
        %v2384 = vrot.slane %v2079, 1
        %v2402 = vunpack.c.l.b16 %v2368
        %v2403 = vunpack.c.l.b16 %v2369
        %v2404 = vunpack.c.l.b16 %v2370
        %v2405 = vunpack.c.l.b16 %v2371
        %v2406 = vunpack.c.l.b16 %v2372
        %v2407 = vunpack.c.l.b16 %v2373
        %v2408 = vunpack.c.l.b16 %v2374
        %v2409 = vunpack.c.l.b16 %v2375
        %v2410 = vunpack.c.l.b16 %v2376
        %v2411 = vunpack.c.l.b16 %v2377
        %v2412 = vunpack.c.l.b16 %v2378
        %v2413 = vunpack.c.l.b16 %v2379
        %v2414 = vunpack.c.l.b16 %v2380
        %v2415 = vunpack.c.l.b16 %v2381
        %v2416 = vunpack.c.l.b16 %v2382
        %v2417 = vunpack.c.l.b16 %v2383
        %v2418 = vpack.c.b16 %v2403, %v2402
        %v2419 = vpack.c.b16 %v2405, %v2404
        %v2420 = vpack.c.b16 %v2407, %v2406
        %v2421 = vpack.c.b16 %v2409, %v2408
        %v2422 = vpack.c.b16 %v2411, %v2410
        %v2423 = vpack.c.b16 %v2413, %v2412
        %v2424 = vpack.c.b16 %v2415, %v2414
        %v2425 = vpack.c.b16 %v2417, %v2416
        %2434 = vmatprep.subr.bf16.mxu0 0
        %2435 = vmatpush1.bf16.msra.mxu0 %v2418
        %2436 = vmatprep.subr.bf16.mxu0 0
        %2437 = vmatpush1.bf16.msra.mxu0 %v2419
        %2438 = vmatprep.subr.bf16.mxu0 0
        %2439 = vmatpush1.bf16.msra.mxu0 %v2420
        %2440 = vmatprep.subr.bf16.mxu0 0
        %2441 = vmatpush1.bf16.msra.mxu0 %v2421
        %2442 = vmatprep.subr.bf16.mxu0 0
        %2443 = vmatpush1.bf16.msra.mxu0 %v2422
        %2444 = vmatprep.subr.bf16.mxu0 0
        %2445 = vmatpush1.bf16.msra.mxu0 %v2423
        %2446 = vmatprep.subr.bf16.mxu0 0
        %2447 = vmatpush1.bf16.msra.mxu0 %v2424
        %2448 = vmatprep.subr.bf16.mxu0 0
        %2449 = vmatpush1.bf16.msra.mxu0 %v2425
        %2450 = vmatprep.subr.bf16.mxu0 0
        %2451 = vmatpush1.bf16.msra.mxu0 0
        %2452 = vmatprep.subr.bf16.mxu0 0
        %2453 = vmatpush1.bf16.msra.mxu0 0
        %2454 = vmatprep.subr.bf16.mxu0 0
        %2455 = vmatpush1.bf16.msra.mxu0 0
        %2456 = vmatprep.subr.bf16.mxu0 0
        %2457 = vmatpush1.bf16.msra.mxu0 0
        %2458 = vmatprep.subr.bf16.mxu0 0
        %2459 = vmatpush1.bf16.msra.mxu0 0
        %2460 = vmatprep.subr.bf16.mxu0 0
        %2461 = vmatpush1.bf16.msra.mxu0 0
        %2462 = vmatprep.subr.bf16.mxu0 0
        %2463 = vmatpush1.bf16.msra.mxu0 0
        %2464 = vmatprep.subr.bf16.mxu0 0
        %2465 = vmatpush1.bf16.msra.mxu0 0
        %2466 = vmatprep.mubr.bf16.mxu0 0
        %2467 = vmatmul.mubr.bf16.gmra.mrb[0].mxu0 %v2384
        %v2468 = vpop.f32.mrb[0].mxu0
        %v2469 = vadd.f32 0.0, %v2468
        %v2470 = vpop.f32.mrb[0].mxu0
        %v2471 = vpop.f32.mrb[0].mxu0
        %v2472 = vpop.f32.mrb[0].mxu0
        %2473 = vdwg.mxu0
        %v2474 = vadd.f32 %v2366, %v2469
        %s2475 = scalar_lea.vmem %s3, 256
        %v2476 = vld [vmem:[%s2475] sm:$0xf]
        %v2477 = vld [vmem:[%s2475 + $0x4] sm:$0xf]
        %v2478 = vld [vmem:[%s2475 + $0x8] sm:$0xf]
        %v2479 = vld [vmem:[%s2475 + $0xc] sm:$0xf]
        %v2480 = vld [vmem:[%s2475 + $0x10] sm:$0xf]
        %v2481 = vld [vmem:[%s2475 + $0x14] sm:$0xf]
        %v2482 = vld [vmem:[%s2475 + $0x18] sm:$0xf]
        %v2483 = vld [vmem:[%s2475 + $0x1c] sm:$0xf]
        %v2484 = vld [vmem:[%s2475 + $0x20] sm:$0xf]
        %v2485 = vld [vmem:[%s2475 + $0x24] sm:$0xf]
        %v2486 = vld [vmem:[%s2475 + $0x28] sm:$0xf]
        %v2487 = vld [vmem:[%s2475 + $0x2c] sm:$0xf]
        %v2488 = vld [vmem:[%s2475 + $0x30] sm:$0xf]
        %v2489 = vld [vmem:[%s2475 + $0x34] sm:$0xf]
        %v2490 = vld [vmem:[%s2475 + $0x38] sm:$0xf]
        %v2491 = vld [vmem:[%s2475 + $0x3c] sm:$0xf]
        %v2492 = vrot.slane %v2044, 2
        %v2510 = vunpack.c.l.b16 %v2476
        %v2511 = vunpack.c.l.b16 %v2477
        %v2512 = vunpack.c.l.b16 %v2478
        %v2513 = vunpack.c.l.b16 %v2479
        %v2514 = vunpack.c.l.b16 %v2480
        %v2515 = vunpack.c.l.b16 %v2481
        %v2516 = vunpack.c.l.b16 %v2482
        %v2517 = vunpack.c.l.b16 %v2483
        %v2518 = vunpack.c.l.b16 %v2484
        %v2519 = vunpack.c.l.b16 %v2485
        %v2520 = vunpack.c.l.b16 %v2486
        %v2521 = vunpack.c.l.b16 %v2487
        %v2522 = vunpack.c.l.b16 %v2488
        %v2523 = vunpack.c.l.b16 %v2489
        %v2524 = vunpack.c.l.b16 %v2490
        %v2525 = vunpack.c.l.b16 %v2491
        %v2526 = vpack.c.b16 %v2511, %v2510
        %v2527 = vpack.c.b16 %v2513, %v2512
        %v2528 = vpack.c.b16 %v2515, %v2514
        %v2529 = vpack.c.b16 %v2517, %v2516
        %v2530 = vpack.c.b16 %v2519, %v2518
        %v2531 = vpack.c.b16 %v2521, %v2520
        %v2532 = vpack.c.b16 %v2523, %v2522
        %v2533 = vpack.c.b16 %v2525, %v2524
        %2542 = vmatprep.subr.bf16.mxu0 0
        %2543 = vmatpush1.bf16.msra.mxu0 %v2526
        %2544 = vmatprep.subr.bf16.mxu0 0
        %2545 = vmatpush1.bf16.msra.mxu0 %v2527
        %2546 = vmatprep.subr.bf16.mxu0 0
        %2547 = vmatpush1.bf16.msra.mxu0 %v2528
        %2548 = vmatprep.subr.bf16.mxu0 0
        %2549 = vmatpush1.bf16.msra.mxu0 %v2529
        %2550 = vmatprep.subr.bf16.mxu0 0
        %2551 = vmatpush1.bf16.msra.mxu0 %v2530
        %2552 = vmatprep.subr.bf16.mxu0 0
        %2553 = vmatpush1.bf16.msra.mxu0 %v2531
        %2554 = vmatprep.subr.bf16.mxu0 0
        %2555 = vmatpush1.bf16.msra.mxu0 %v2532
        %2556 = vmatprep.subr.bf16.mxu0 0
        %2557 = vmatpush1.bf16.msra.mxu0 %v2533
        %2558 = vmatprep.subr.bf16.mxu0 0
        %2559 = vmatpush1.bf16.msra.mxu0 0
        %2560 = vmatprep.subr.bf16.mxu0 0
        %2561 = vmatpush1.bf16.msra.mxu0 0
        %2562 = vmatprep.subr.bf16.mxu0 0
        %2563 = vmatpush1.bf16.msra.mxu0 0
        %2564 = vmatprep.subr.bf16.mxu0 0
        %2565 = vmatpush1.bf16.msra.mxu0 0
        %2566 = vmatprep.subr.bf16.mxu0 0
        %2567 = vmatpush1.bf16.msra.mxu0 0
        %2568 = vmatprep.subr.bf16.mxu0 0
        %2569 = vmatpush1.bf16.msra.mxu0 0
        %2570 = vmatprep.subr.bf16.mxu0 0
        %2571 = vmatpush1.bf16.msra.mxu0 0
        %2572 = vmatprep.subr.bf16.mxu0 0
        %2573 = vmatpush1.bf16.msra.mxu0 0
        %2574 = vmatprep.mubr.bf16.mxu0 0
        %2575 = vmatmul.mubr.bf16.gmra.mrb[0].mxu0 %v2492
        %v2576 = vpop.f32.mrb[0].mxu0
        %v2577 = vadd.f32 0.0, %v2576
        %v2578 = vpop.f32.mrb[0].mxu0
        %v2579 = vpop.f32.mrb[0].mxu0
        %v2580 = vpop.f32.mrb[0].mxu0
        %2581 = vdwg.mxu0
        %v2582 = vadd.f32 %v2474, %v2577
        %v2583 = vmax.f32 %v2582, 0.0
        %v2584 = vld [vmem:[%s4] sm:$0xff]
        %v2585 = vld [vmem:[%s4 + $0x8] sm:$0xff]
        %v2586 = vld [vmem:[%s4 + $0x10] sm:$0xff]
        %v2587 = vld [vmem:[%s4 + $0x18] sm:$0xff]
        %v2588 = vld [vmem:[%s4 + $0x20] sm:$0xff]
        %v2589 = vld [vmem:[%s4 + $0x28] sm:$0xff]
        %v2590 = vld [vmem:[%s4 + $0x30] sm:$0xff]
        %v2591 = vld [vmem:[%s4 + $0x38] sm:$0xff]
        %v2592 = vld [vmem:[%s4 + $0x40] sm:$0xff]
        %v2593 = vld [vmem:[%s4 + $0x48] sm:$0xff]
        %v2594 = vld [vmem:[%s4 + $0x50] sm:$0xff]
        %v2595 = vld [vmem:[%s4 + $0x58] sm:$0xff]
        %v2596 = vld [vmem:[%s4 + $0x60] sm:$0xff]
        %v2597 = vld [vmem:[%s4 + $0x68] sm:$0xff]
        %v2598 = vld [vmem:[%s4 + $0x70] sm:$0xff]
        %v2599 = vld [vmem:[%s4 + $0x78] sm:$0xff]
        %2600 = vmatprep.subr.mxu0 0.0
        %2601 = vmatpush1.msra.mxu0 %v2584
        %2602 = vmatprep.subr.mxu0 0.0
        %2603 = vmatpush1.msra.mxu0 %v2585
        %2604 = vmatprep.subr.mxu0 0.0
        %2605 = vmatpush1.msra.mxu0 %v2586
        %2606 = vmatprep.subr.mxu0 0.0
        %2607 = vmatpush1.msra.mxu0 %v2587
        %2608 = vmatprep.subr.mxu0 0.0
        %2609 = vmatpush1.msra.mxu0 %v2588
        %2610 = vmatprep.subr.mxu0 0.0
        %2611 = vmatpush1.msra.mxu0 %v2589
        %2612 = vmatprep.subr.mxu0 0.0
        %2613 = vmatpush1.msra.mxu0 %v2590
        %2614 = vmatprep.subr.mxu0 0.0
        %2615 = vmatpush1.msra.mxu0 %v2591
        %2616 = vmatprep.subr.mxu0 0.0
        %2617 = vmatpush1.msra.mxu0 %v2592
        %2618 = vmatprep.subr.mxu0 0.0
        %2619 = vmatpush1.msra.mxu0 %v2593
        %2620 = vmatprep.subr.mxu0 0.0
        %2621 = vmatpush1.msra.mxu0 %v2594
        %2622 = vmatprep.subr.mxu0 0.0
        %2623 = vmatpush1.msra.mxu0 %v2595
        %2624 = vmatprep.subr.mxu0 0.0
        %2625 = vmatpush1.msra.mxu0 %v2596
        %2626 = vmatprep.subr.mxu0 0.0
        %2627 = vmatpush1.msra.mxu0 %v2597
        %2628 = vmatprep.subr.mxu0 0.0
        %2629 = vmatpush1.msra.mxu0 %v2598
        %2630 = vmatprep.subr.mxu0 0.0
        %2631 = vmatpush1.msra.mxu0 %v2599
        %2632 = vmatprep.subr.mxu0 0.0
        %2633 = vmatpush1.msra.mxu0 0.0
        %2634 = vmatprep.subr.mxu0 0.0
        %2635 = vmatpush1.msra.mxu0 0.0
        %2636 = vmatprep.subr.mxu0 0.0
        %2637 = vmatpush1.msra.mxu0 0.0
        %2638 = vmatprep.subr.mxu0 0.0
        %2639 = vmatpush1.msra.mxu0 0.0
        %2640 = vmatprep.subr.mxu0 0.0
        %2641 = vmatpush1.msra.mxu0 0.0
        %2642 = vmatprep.subr.mxu0 0.0
        %2643 = vmatpush1.msra.mxu0 0.0
        %2644 = vmatprep.subr.mxu0 0.0
        %2645 = vmatpush1.msra.mxu0 0.0
        %2646 = vmatprep.subr.mxu0 0.0
        %2647 = vmatpush1.msra.mxu0 0.0
        %2648 = vmatprep.subr.mxu0 0.0
        %2649 = vmatpush1.msra.mxu0 0.0
        %2650 = vmatprep.subr.mxu0 0.0
        %2651 = vmatpush1.msra.mxu0 0.0
        %2652 = vmatprep.subr.mxu0 0.0
        %2653 = vmatpush1.msra.mxu0 0.0
        %2654 = vmatprep.subr.mxu0 0.0
        %2655 = vmatpush1.msra.mxu0 0.0
        %2656 = vmatprep.subr.mxu0 0.0
        %2657 = vmatpush1.msra.mxu0 0.0
        %2658 = vmatprep.subr.mxu0 0.0
        %2659 = vmatpush1.msra.mxu0 0.0
        %2660 = vmatprep.subr.mxu0 0.0
        %2661 = vmatpush1.msra.mxu0 0.0
        %2662 = vmatprep.subr.mxu0 0.0
        %2663 = vmatpush1.msra.mxu0 0.0
        %2664 = vmatprep.mubr.f32.mxu0 0.0
        %2665 = vmatmul.mubr.f32.gmra.mrb[0].mxu0 %v2583
        %v2666 = vpop.f32.mrb[0].mxu0
        %v2667 = vadd.f32 0.0, %v2666
        %v2668 = vpop.f32.mrb[0].mxu0
        %2669 = vdwg.mxu0
        %v2670 = vmax.f32 %v2667, 0.0
        %v2671 = vld [vmem:[%s5] sm:$0xff]
        %v2672 = vld [vmem:[%s5 + $0x8] sm:$0xff]
        %v2673 = vld [vmem:[%s5 + $0x10] sm:$0xff]
        %v2674 = vld [vmem:[%s5 + $0x18] sm:$0xff]
        %v2675 = vld [vmem:[%s5 + $0x20] sm:$0xff]
        %v2676 = vld [vmem:[%s5 + $0x28] sm:$0xff]
        %v2677 = vld [vmem:[%s5 + $0x30] sm:$0xff]
        %v2678 = vld [vmem:[%s5 + $0x38] sm:$0xff]
        %v2679 = vld [vmem:[%s5 + $0x40] sm:$0xff]
        %v2680 = vld [vmem:[%s5 + $0x48] sm:$0xff]
        %v2681 = vld [vmem:[%s5 + $0x50] sm:$0xff]
        %v2682 = vld [vmem:[%s5 + $0x58] sm:$0xff]
        %v2683 = vld [vmem:[%s5 + $0x60] sm:$0xff]
        %v2684 = vld [vmem:[%s5 + $0x68] sm:$0xff]
        %v2685 = vld [vmem:[%s5 + $0x70] sm:$0xff]
        %v2686 = vld [vmem:[%s5 + $0x78] sm:$0xff]
        %2687 = vmatprep.subr.mxu0 0.0
        %2688 = vmatpush1.msra.mxu0 %v2671
        %2689 = vmatprep.subr.mxu0 0.0
        %2690 = vmatpush1.msra.mxu0 %v2672
        %2691 = vmatprep.subr.mxu0 0.0
        %2692 = vmatpush1.msra.mxu0 %v2673
        %2693 = vmatprep.subr.mxu0 0.0
        %2694 = vmatpush1.msra.mxu0 %v2674
        %2695 = vmatprep.subr.mxu0 0.0
        %2696 = vmatpush1.msra.mxu0 %v2675
        %2697 = vmatprep.subr.mxu0 0.0
        %2698 = vmatpush1.msra.mxu0 %v2676
        %2699 = vmatprep.subr.mxu0 0.0
        %2700 = vmatpush1.msra.mxu0 %v2677
        %2701 = vmatprep.subr.mxu0 0.0
        %2702 = vmatpush1.msra.mxu0 %v2678
        %2703 = vmatprep.subr.mxu0 0.0
        %2704 = vmatpush1.msra.mxu0 %v2679
        %2705 = vmatprep.subr.mxu0 0.0
        %2706 = vmatpush1.msra.mxu0 %v2680
        %2707 = vmatprep.subr.mxu0 0.0
        %2708 = vmatpush1.msra.mxu0 %v2681
        %2709 = vmatprep.subr.mxu0 0.0
        %2710 = vmatpush1.msra.mxu0 %v2682
        %2711 = vmatprep.subr.mxu0 0.0
        %2712 = vmatpush1.msra.mxu0 %v2683
        %2713 = vmatprep.subr.mxu0 0.0
        %2714 = vmatpush1.msra.mxu0 %v2684
        %2715 = vmatprep.subr.mxu0 0.0
        %2716 = vmatpush1.msra.mxu0 %v2685
        %2717 = vmatprep.subr.mxu0 0.0
        %2718 = vmatpush1.msra.mxu0 %v2686
        %2719 = vmatprep.subr.mxu0 0.0
        %2720 = vmatpush1.msra.mxu0 0.0
        %2721 = vmatprep.subr.mxu0 0.0
        %2722 = vmatpush1.msra.mxu0 0.0
        %2723 = vmatprep.subr.mxu0 0.0
        %2724 = vmatpush1.msra.mxu0 0.0
        %2725 = vmatprep.subr.mxu0 0.0
        %2726 = vmatpush1.msra.mxu0 0.0
        %2727 = vmatprep.subr.mxu0 0.0
        %2728 = vmatpush1.msra.mxu0 0.0
        %2729 = vmatprep.subr.mxu0 0.0
        %2730 = vmatpush1.msra.mxu0 0.0
        %2731 = vmatprep.subr.mxu0 0.0
        %2732 = vmatpush1.msra.mxu0 0.0
        %2733 = vmatprep.subr.mxu0 0.0
        %2734 = vmatpush1.msra.mxu0 0.0
        %2735 = vmatprep.subr.mxu0 0.0
        %2736 = vmatpush1.msra.mxu0 0.0
        %2737 = vmatprep.subr.mxu0 0.0
        %2738 = vmatpush1.msra.mxu0 0.0
        %2739 = vmatprep.subr.mxu0 0.0
        %2740 = vmatpush1.msra.mxu0 0.0
        %2741 = vmatprep.subr.mxu0 0.0
        %2742 = vmatpush1.msra.mxu0 0.0
        %2743 = vmatprep.subr.mxu0 0.0
        %2744 = vmatpush1.msra.mxu0 0.0
        %2745 = vmatprep.subr.mxu0 0.0
        %2746 = vmatpush1.msra.mxu0 0.0
        %2747 = vmatprep.subr.mxu0 0.0
        %2748 = vmatpush1.msra.mxu0 0.0
        %2749 = vmatprep.subr.mxu0 0.0
        %2750 = vmatpush1.msra.mxu0 0.0
        %2751 = vmatprep.mubr.f32.mxu0 0.0
        %2752 = vmatmul.mubr.f32.gmra.mrb[0].mxu0 %v2670
        %v2753 = vpop.f32.mrb[0].mxu0
        %v2754 = vadd.f32 0.0, %v2753
        %v2755 = vpop.f32.mrb[0].mxu0
        %2756 = vdwg.mxu0
        %2757 = vst [vmem:[%s243] sm:$0x1] %v2754
        %s2758 = sand.u32 %s159, 1
        %s2759 = scalar_lea.sflag [#allocation4], %s2758
        %s2760 = sand.u32 %s159, 1
        %s2761 = scalar_lea.vmem [#allocation3], %s2760
        // Predicated region
        $region45: #{lenet5_forward.1} parent=43 // pred_check
          %p2762 = pneg %p169
        $region46: #{lenet5_forward.1} parent=43 // pred_check_branch
          %2764 = sbr.rel (%p2762) target = $region48
        $region47: #{lenet5_forward.1} parent=43 // pred_region
          %s2766 = ssub.s32 16, 16
          %2767 = vsyncadd %s2759, %s2766
          %s2768 = smul.addr %s20, 16
          %s2769 = scalar_lea.hbm %s6, %s2768
          %s2771 = sshll.u32 %s2761, 4
          %s2772 = int_to_ptr.vmem [resolvable:$true] %s2771
          %2774 = dma.vmem_to_hbm [thread:$0]  %s2772, 16, %s2769, %s2759
        $region48: #{lenet5_forward.1} parent=43 // pred_fallthru
          _
      $region44: #{lenet5_forward.1} parent=5 // pred_fallthru
        _
      %p2775 = scmp.le.s32.totalorder 2, %s15
      // Predicated region
      $region49: #{lenet5_forward.1} parent=5 // pred_check
        %p2776 = pneg %p2775
      $region50: #{lenet5_forward.1} parent=5 // pred_check_branch
        %2778 = sbr.rel (%p2776) target = $region52
      $region51: #{lenet5_forward.1} parent=5 // pred_region
        %s2779 = ssub.s32 %s15, 2
        // Predicated region
        $region53: #{lenet5_forward.1} parent=51 // pred_check
          %p2780 = pneg %p175
        $region54: #{lenet5_forward.1} parent=51 // pred_check_branch
          %2782 = sbr.rel (%p2780) target = $region56
        $region55: #{lenet5_forward.1} parent=51 // pred_region
          %s2783 = sand.u32 %s160, 1
          %s2784 = scalar_lea.sflag [#allocation4], %s2783
          %s2785 = sand.u32 %s160, 1
          %s2786 = scalar_lea.vmem [#allocation3], %s2785
          %2787 = dma.done %s2784, 16
        $region56: #{lenet5_forward.1} parent=51 // pred_fallthru
          _
      $region52: #{lenet5_forward.1} parent=5 // pred_fallthru
        _
    $region6: #{lenet5_forward.1} parent=1 // loop_footer
      %s19 = sadd.s32 1, %s15
    $region7: #{lenet5_forward.1} parent=1 // loop_footer_branch
      %14 = sbr.rel target = $region3
    $region8: #{lenet5_forward.1} parent=1 // loop_exit
      _
    %2788 = vsyncpa [#allocation4], 1
    %s2789 = scalar_lea.sflag [#allocation4], 1
    %2790 = vsyncpa %s2789, 1

</llo_original>
